<compile_context>
chip_gen: v5e
topology: v5e:2x2
jax: 0.10.0
libtpu: 0.0.40
codegen_flags: <defaults>
</compile_context>

<pallas_src>
import math
import numpy as np
import jax
import jax.numpy as jnp
from jax import lax
from jax.experimental import pallas as pl
from jax.experimental.pallas import tpu as pltpu

WINDOW_SIZE = 11
PAD = WINDOW_SIZE // 2
SIGMA = 1.5
C1 = 0.01 ** 2
C2 = 0.03 ** 2


def _gaussian_1d_np(ws=WINDOW_SIZE, sigma=SIGMA):
    # Matches SSIMLoss._gaussian (normalized 1-D Gaussian).
    g = np.array(
        [math.exp(-((x - ws // 2) ** 2) / (2.0 * sigma ** 2)) for x in range(ws)],
        dtype=np.float64,
    )
    return (g / g.sum()).astype(np.float32)


_W1D = _gaussian_1d_np()                         # (11,) separable factors
_W2D = np.outer(_W1D, _W1D).astype(np.float32)   # (11,11) used only by the reference


def _toeplitz_blur_matrix(n):
    """(n, n) clipped-Toeplitz M so that `x @ M` == zero-padded 'same' 1-D blur."""
    m = np.zeros((n, n), dtype=np.float32)
    for i in range(n):
        for j in range(max(0, i - PAD), min(n, i + PAD + 1)):
            m[i, j] = _W1D[j - i + PAD]          # symmetric band
    return m


def _block_diag(mat, copies):
    n = mat.shape[0]
    out = np.zeros((n * copies, n * copies), dtype=np.float32)
    for p in range(copies):
        out[p * n:(p + 1) * n, p * n:(p + 1) * n] = mat
    return out


def _ssim_kernel(mh_ref, mw_ref, x1_ref, x2_ref, out_ref):
    mh = mh_ref[...]      # (H, H)    H-axis Toeplitz blur (left multiply)
    mw = mw_ref[...]      # (Lb, Lb)  block-diag W-axis Toeplitz blur (right multiply)
    x1 = x1_ref[...]      # (H, Lb)   P planes folded onto the lane axis
    x2 = x2_ref[...]

    def blur(f):
        # Both passes are canonical 2-D MXU matmuls; zero padding is encoded
        # in the clipped Toeplitz band, so no padded buffers are needed.
        y = jnp.dot(f, mw, preferred_element_type=jnp.float32,
                    precision=lax.Precision.HIGHEST)
        return jnp.dot(mh, y, preferred_element_type=jnp.float32,
                       precision=lax.Precision.HIGHEST)

    mu1, mu2 = blur(x1), blur(x2)
    s11, s22, s12 = blur(x1 * x1), blur(x2 * x2), blur(x1 * x2)

    mu1_sq, mu2_sq, mu1_mu2 = mu1 * mu1, mu2 * mu2, mu1 * mu2
    sigma1_sq = s11 - mu1_sq
    sigma2_sq = s22 - mu2_sq
    sigma12 = s12 - mu1_mu2

    num = (2.0 * mu1_mu2 + C1) * (2.0 * sigma12 + C2)
    den = (mu1_sq + mu2_sq + C1) * (sigma1_sq + sigma2_sq + C2)
    r = pl.reciprocal(den, approx=True)     # EUP (otherwise idle slot)
    r = r * (2.0 - den * r)                 # one Newton step -> ~f32-exact
    ssim_map = num * r                      # (H, Lb), fully lane-dense

    # Lane-dense per-step partial-sum tile; wrapper reduces across grid steps
    # (keeps the grid "parallel" / megacore-friendly).
    out_ref[...] = jnp.full((1, 8, 128), jnp.sum(ssim_map), dtype=jnp.float32)


def _vmem_plan():
    """Generation-aware (planning_budget, vmem_limit_bytes)."""
    cap = 64 * 1024 * 1024                  # conservative default (v7x per-TC)
    try:
        cap = int(getattr(pltpu.get_tpu_info(), "vmem_capacity_bytes", cap))
    except Exception:
        pass
    budget = max(16 * 1024 * 1024, int(cap * 0.45))
    limit = min(int(cap * 0.75), 96 * 1024 * 1024)
    return budget, limit


def _plan_planes_per_step(n, H, W, budget):
    """Planes folded per grid step (block lane width = P * W)."""
    cdiv = lambda a, b: -(-a // b)
    # Lane-group granularity so that every non-full block width is a multiple
    # of 128 lanes (BlockSpec constraint) and the elementwise tail is dense.
    p_step = 1 if W % 128 == 0 else 128 // math.gcd(W, 128)
    max_lanes = max(512, p_step * W)        # bounds block-diag FLOP/VMEM waste

    def vmem_est(p):
        lb = p * W
        # ~14 live (H, Lb) f32 arrays (double-buffered inputs + intermediates)
        # + double-buffered block-diagonal W-blur matrix.
        return 4 * (16 * H * lb + 2 * lb * lb)

    P = p_step
    while P < n and (P + p_step) * W <= max_lanes and vmem_est(P + p_step) <= budget:
        P += p_step

    if cdiv(n, P) < 2:
        # Prefer >= 2 grid steps so both v7x TensorCores get work.
        P2 = p_step * cdiv(cdiv(n, 2), p_step)
        if p_step < n and P2 < n:
            P = P2
        else:
            P = n   # single block == full array width (any lane width allowed)
    # TODO(synk): widths where 128/gcd(W,128) is large relative to B*C make the
    # block-diagonal W-blur matrix large; such awkward shapes are unoptimized.
    # TODO(synk): a single plane larger than the VMEM budget would need
    # H-tiling with a PAD-row halo; not implemented.
    return P


def ssim_loss(img1, img2):
    """1 - mean(SSIM(img1, img2)); size_average=True path of SSIMLoss.forward."""
    # TODO(synk): size_average=False (per-image mean) reduction path not implemented.
    B, C, H, W = img1.shape
    n = B * C

    budget, vmem_limit = _vmem_plan()
    P = _plan_planes_per_step(n, H, W, budget)
    G = -(-n // P)
    n_pad = G * P
    Lb = P * W

    x1 = img1.astype(jnp.float32).reshape(n, H, W)
    x2 = img2.astype(jnp.float32).reshape(n, H, W)
    if n_pad != n:
        z = jnp.zeros((n_pad - n, H, W), jnp.float32)
        x1 = jnp.concatenate([x1, z], axis=0)
        x2 = jnp.concatenate([x2, z], axis=0)

    # Fold planes onto the lane axis: (n_pad, H, W) -> (H, n_pad * W).
    a1 = jnp.transpose(x1, (1, 0, 2)).reshape(H, n_pad * W)
    a2 = jnp.transpose(x2, (1, 0, 2)).reshape(H, n_pad * W)

    mh = jnp.asarray(_toeplitz_blur_matrix(H))                 # (H, H)
    mw = jnp.asarray(_block_diag(_toeplitz_blur_matrix(W), P)) # (Lb, Lb)

    partial = pl.pallas_call(
        _ssim_kernel,
        out_shape=jax.ShapeDtypeStruct((G, 8, 128), jnp.float32),
        grid_spec=pltpu.PrefetchScalarGridSpec(
            num_scalar_prefetch=0,
            grid=(G,),
            in_specs=[
                pl.BlockSpec((H, H), lambda g: (0, 0)),     # M_H (constant block)
                pl.BlockSpec((Lb, Lb), lambda g: (0, 0)),   # M_W block-diag (constant)
                pl.BlockSpec((H, Lb), lambda g: (0, g)),    # img1 lane-folded planes
                pl.BlockSpec((H, Lb), lambda g: (0, g)),    # img2 lane-folded planes
            ],
            out_specs=pl.BlockSpec((1, 8, 128), lambda g: (g, 0, 0)),
        ),
        compiler_params=pltpu.CompilerParams(
            dimension_semantics=("parallel",),   # independent plane-blocks
            vmem_limit_bytes=vmem_limit,
        ),
    )(mh, mw, a1, a2)

    total = jnp.sum(partial) * (1.0 / (8 * 128))
    # Padded all-zero planes have ssim == 1 everywhere: subtract their exact
    # contribution before taking the mean over the real planes.
    total = total - float((n_pad - n) * H * W)
    return 1.0 - total / float(n * H * W)


def _reference_ssim_loss(img1, img2):
    """Pure-JAX reference (mirrors F.conv2d groups=C path) for sanity check."""
    B, C, H, W = img1.shape
    win = jnp.broadcast_to(jnp.asarray(_W2D), (C, 1, WINDOW_SIZE, WINDOW_SIZE))

    def conv(x):
        return lax.conv_general_dilated(
            x, win, window_strides=(1, 1), padding=[(PAD, PAD), (PAD, PAD)],
            dimension_numbers=("NCHW", "OIHW", "NCHW"), feature_group_count=C,
            precision=lax.Precision.HIGHEST)

    mu1, mu2 = conv(img1), conv(img2)
    mu1_sq, mu2_sq, mu1_mu2 = mu1 * mu1, mu2 * mu2, mu1 * mu2
    sigma1_sq = conv(img1 * img1) - mu1_sq
    sigma2_sq = conv(img2 * img2) - mu2_sq
    sigma12 = conv(img1 * img2) - mu1_mu2
    ssim_map = ((2 * mu1_mu2 + C1) * (2 * sigma12 + C2)) / (
        (mu1_sq + mu2_sq + C1) * (sigma1_sq + sigma2_sq + C2))
    return 1.0 - jnp.mean(ssim_map)


if __name__ == "__main__":
    key = jax.random.PRNGKey(0)
    k1, k2 = jax.random.split(key)
    B, C, H, W = 2, 4, 16, 16
    img1 = jax.random.uniform(k1, (B, C, H, W), dtype=jnp.float32)
    img2 = jax.random.uniform(k2, (B, C, H, W), dtype=jnp.float32)

    loss = jax.block_until_ready(ssim_loss(img1, img2))
    ref = jax.block_until_ready(_reference_ssim_loss(img1, img2))

    np.testing.assert_allclose(np.asarray(loss), np.asarray(ref),
                               rtol=1e-4, atol=1e-5)
    print("KERNEL_OK")
</pallas_src>

<mosaic_0001>
module attributes {stable_mosaic.version = 11 : i64} {
  func.func @_ssim_kernel(%arg0: i32, %arg1: memref<16x16xf32, #tpu.memory_space<vmem>>, %arg2: memref<128x128xf32, #tpu.memory_space<vmem>>, %arg3: memref<16x128xf32, #tpu.memory_space<vmem>>, %arg4: memref<16x128xf32, #tpu.memory_space<vmem>>, %arg5: memref<1x8x128xf32, #tpu.memory_space<vmem>>) attributes {dimension_semantics = [#tpu.dimension_semantics<parallel>], iteration_bounds = array<i64: 1>, scalar_prefetch = 0 : i64, scratch_operands = 0 : i64, tpu.core_type = #tpu.core_type<tc>, window_params = [{pipeline_mode = #tpu.pipeline_mode<synchronous>, transform_indices = @transform_0, window_bounds = array<i64: 16, 16>}, {pipeline_mode = #tpu.pipeline_mode<synchronous>, transform_indices = @transform_1, window_bounds = array<i64: 128, 128>}, {transform_indices = @transform_2, window_bounds = array<i64: 16, 128>}, {transform_indices = @transform_3, window_bounds = array<i64: 16, 128>}, {transform_indices = @transform_4, window_bounds = array<i64: 1, 8, 128>}]} {
    %c0 = arith.constant 0 : index
    %c0_0 = arith.constant 0 : index
    %0 = vector.load %arg1[%c0, %c0_0] : memref<16x16xf32, #tpu.memory_space<vmem>>, vector<16x16xf32>
    %c0_1 = arith.constant 0 : index
    %c0_2 = arith.constant 0 : index
    %1 = vector.load %arg2[%c0_1, %c0_2] : memref<128x128xf32, #tpu.memory_space<vmem>>, vector<128x128xf32>
    %c0_3 = arith.constant 0 : index
    %c0_4 = arith.constant 0 : index
    %2 = vector.load %arg3[%c0_3, %c0_4] : memref<16x128xf32, #tpu.memory_space<vmem>>, vector<16x128xf32>
    %c0_5 = arith.constant 0 : index
    %c0_6 = arith.constant 0 : index
    %3 = vector.load %arg4[%c0_5, %c0_6] : memref<16x128xf32, #tpu.memory_space<vmem>>, vector<16x128xf32>
    %cst = arith.constant dense<0.000000e+00> : vector<16x128xf32>
    %4 = tpu.matmul %2, %1, %cst {dimension_numbers = #tpu.dot_dimension_numbers<[1], [0], [0], [1], [0, 0, 1, 1], [], []>, precision = #tpu.contract_precision<fp32>} : vector<16x128xf32>, vector<128x128xf32>, vector<16x128xf32> -> vector<16x128xf32>
    %cst_7 = arith.constant dense<0.000000e+00> : vector<16x128xf32>
    %5 = tpu.matmul %0, %4, %cst_7 {dimension_numbers = #tpu.dot_dimension_numbers<[1], [0], [0], [1], [0, 0, 1, 1], [], []>, precision = #tpu.contract_precision<fp32>} : vector<16x16xf32>, vector<16x128xf32>, vector<16x128xf32> -> vector<16x128xf32>
    %cst_8 = arith.constant dense<0.000000e+00> : vector<16x128xf32>
    %6 = tpu.matmul %3, %1, %cst_8 {dimension_numbers = #tpu.dot_dimension_numbers<[1], [0], [0], [1], [0, 0, 1, 1], [], []>, precision = #tpu.contract_precision<fp32>} : vector<16x128xf32>, vector<128x128xf32>, vector<16x128xf32> -> vector<16x128xf32>
    %cst_9 = arith.constant dense<0.000000e+00> : vector<16x128xf32>
    %7 = tpu.matmul %0, %6, %cst_9 {dimension_numbers = #tpu.dot_dimension_numbers<[1], [0], [0], [1], [0, 0, 1, 1], [], []>, precision = #tpu.contract_precision<fp32>} : vector<16x16xf32>, vector<16x128xf32>, vector<16x128xf32> -> vector<16x128xf32>
    %8 = arith.mulf %2, %2 : vector<16x128xf32>
    %cst_10 = arith.constant dense<0.000000e+00> : vector<16x128xf32>
    %9 = tpu.matmul %8, %1, %cst_10 {dimension_numbers = #tpu.dot_dimension_numbers<[1], [0], [0], [1], [0, 0, 1, 1], [], []>, precision = #tpu.contract_precision<fp32>} : vector<16x128xf32>, vector<128x128xf32>, vector<16x128xf32> -> vector<16x128xf32>
    %cst_11 = arith.constant dense<0.000000e+00> : vector<16x128xf32>
    %10 = tpu.matmul %0, %9, %cst_11 {dimension_numbers = #tpu.dot_dimension_numbers<[1], [0], [0], [1], [0, 0, 1, 1], [], []>, precision = #tpu.contract_precision<fp32>} : vector<16x16xf32>, vector<16x128xf32>, vector<16x128xf32> -> vector<16x128xf32>
    %11 = arith.mulf %3, %3 : vector<16x128xf32>
    %cst_12 = arith.constant dense<0.000000e+00> : vector<16x128xf32>
    %12 = tpu.matmul %11, %1, %cst_12 {dimension_numbers = #tpu.dot_dimension_numbers<[1], [0], [0], [1], [0, 0, 1, 1], [], []>, precision = #tpu.contract_precision<fp32>} : vector<16x128xf32>, vector<128x128xf32>, vector<16x128xf32> -> vector<16x128xf32>
    %cst_13 = arith.constant dense<0.000000e+00> : vector<16x128xf32>
    %13 = tpu.matmul %0, %12, %cst_13 {dimension_numbers = #tpu.dot_dimension_numbers<[1], [0], [0], [1], [0, 0, 1, 1], [], []>, precision = #tpu.contract_precision<fp32>} : vector<16x16xf32>, vector<16x128xf32>, vector<16x128xf32> -> vector<16x128xf32>
    %14 = arith.mulf %2, %3 : vector<16x128xf32>
    %cst_14 = arith.constant dense<0.000000e+00> : vector<16x128xf32>
    %15 = tpu.matmul %14, %1, %cst_14 {dimension_numbers = #tpu.dot_dimension_numbers<[1], [0], [0], [1], [0, 0, 1, 1], [], []>, precision = #tpu.contract_precision<fp32>} : vector<16x128xf32>, vector<128x128xf32>, vector<16x128xf32> -> vector<16x128xf32>
    %cst_15 = arith.constant dense<0.000000e+00> : vector<16x128xf32>
    %16 = tpu.matmul %0, %15, %cst_15 {dimension_numbers = #tpu.dot_dimension_numbers<[1], [0], [0], [1], [0, 0, 1, 1], [], []>, precision = #tpu.contract_precision<fp32>} : vector<16x16xf32>, vector<16x128xf32>, vector<16x128xf32> -> vector<16x128xf32>
    %17 = arith.mulf %5, %5 : vector<16x128xf32>
    %18 = arith.mulf %7, %7 : vector<16x128xf32>
    %19 = arith.mulf %5, %7 : vector<16x128xf32>
    %20 = arith.subf %10, %17 : vector<16x128xf32>
    %21 = arith.subf %13, %18 : vector<16x128xf32>
    %22 = arith.subf %16, %19 : vector<16x128xf32>
    %cst_16 = arith.constant 2.000000e+00 : f32
    %23 = vector.broadcast %cst_16 : f32 to vector<16x128xf32>
    %24 = arith.mulf %23, %19 : vector<16x128xf32>
    %cst_17 = arith.constant 9.99999974E-5 : f32
    %25 = vector.broadcast %cst_17 : f32 to vector<16x128xf32>
    %26 = arith.addf %24, %25 : vector<16x128xf32>
    %cst_18 = arith.constant 2.000000e+00 : f32
    %27 = vector.broadcast %cst_18 : f32 to vector<16x128xf32>
    %28 = arith.mulf %27, %22 : vector<16x128xf32>
    %cst_19 = arith.constant 8.99999984E-4 : f32
    %29 = vector.broadcast %cst_19 : f32 to vector<16x128xf32>
    %30 = arith.addf %28, %29 : vector<16x128xf32>
    %31 = arith.mulf %26, %30 : vector<16x128xf32>
    %32 = arith.addf %17, %18 : vector<16x128xf32>
    %cst_20 = arith.constant 9.99999974E-5 : f32
    %33 = vector.broadcast %cst_20 : f32 to vector<16x128xf32>
    %34 = arith.addf %32, %33 : vector<16x128xf32>
    %35 = arith.addf %20, %21 : vector<16x128xf32>
    %cst_21 = arith.constant 8.99999984E-4 : f32
    %36 = vector.broadcast %cst_21 : f32 to vector<16x128xf32>
    %37 = arith.addf %35, %36 : vector<16x128xf32>
    %38 = arith.mulf %34, %37 : vector<16x128xf32>
    %39 = tpu.reciprocal %38 {approx = true} : vector<16x128xf32> -> vector<16x128xf32>
    %40 = arith.mulf %38, %39 : vector<16x128xf32>
    %cst_22 = arith.constant 2.000000e+00 : f32
    %41 = vector.broadcast %cst_22 : f32 to vector<16x128xf32>
    %42 = arith.subf %41, %40 : vector<16x128xf32>
    %43 = arith.mulf %39, %42 : vector<16x128xf32>
    %44 = arith.mulf %31, %43 : vector<16x128xf32>
    %45 = vector.shape_cast %44 : vector<16x128xf32> to vector<1x16x128xf32>
    %cst_23 = arith.constant dense<0.000000e+00> : vector<1xf32>
    %46 = vector.multi_reduction <add>, %45, %cst_23 [1, 2] : vector<1x16x128xf32> to vector<1xf32>
    %47 = vector.shape_cast %46 : vector<1xf32> to vector<1x1x1xf32>
    %48 = vector.extract %47[0, 0, 0] : f32 from vector<1x1x1xf32>
    %49 = vector.broadcast %48 : f32 to vector<1x8x128xf32>
    %c0_24 = arith.constant 0 : index
    %c0_25 = arith.constant 0 : index
    %c0_26 = arith.constant 0 : index
    %50 = vector.load %arg5[%c0_24, %c0_25, %c0_26] : memref<1x8x128xf32, #tpu.memory_space<vmem>>, vector<1x8x128xf32>
    tpu.vector_store %arg5[%c0_24, %c0_25, %c0_26], %49 {strides = array<i32>} : memref<1x8x128xf32, #tpu.memory_space<vmem>>, vector<1x8x128xf32>,
    return
  }
  func.func @transform_0(%arg0: i32) -> (i32, i32) {
    %c0_i32 = arith.constant 0 : i32
    %c0_i32_0 = arith.constant 0 : i32
    %c0_i32_1 = arith.constant 0 : i32
    return %c0_i32, %c0_i32_0 : i32, i32
  }
  func.func @transform_1(%arg0: i32) -> (i32, i32) {
    %c0_i32 = arith.constant 0 : i32
    %c0_i32_0 = arith.constant 0 : i32
    %c0_i32_1 = arith.constant 0 : i32
    return %c0_i32, %c0_i32_0 : i32, i32
  }
  func.func @transform_2(%arg0: i32) -> (i32, i32) {
    %c0_i32 = arith.constant 0 : i32
    %c0_i32_0 = arith.constant 0 : i32
    return %c0_i32, %arg0 : i32, i32
  }
  func.func @transform_3(%arg0: i32) -> (i32, i32) {
    %c0_i32 = arith.constant 0 : i32
    %c0_i32_0 = arith.constant 0 : i32
    return %c0_i32, %arg0 : i32, i32
  }
  func.func @transform_4(%arg0: i32) -> (i32, i32, i32) {
    %c0_i32 = arith.constant 0 : i32
    %c0_i32_0 = arith.constant 0 : i32
    %c0_i32_1 = arith.constant 0 : i32
    return %arg0, %c0_i32, %c0_i32_0 : i32, i32, i32
  }
}

</mosaic_0001>

<llo_original>
// kernel: tpu_custom_call.1
$region0: #{tpu_custom_call.1}
  #allocation0 [shape = 'u32[]', space=smem, size = 0x4, offset = 0x4, fixed_abs, tag = 'smem constant byte address 0x4 - core index']
  #allocation1 [shape = 'u32[72,128]{1,0:T(1,128)}', space=vmem, size = 0x9000, scoped, tag = 'internal scratch']
  %s0 = inlined_call_operand.hbm [shape: f32[16,16], index: 0, kind: input, shape index: {}]
  %s1 = inlined_call_operand.hbm [shape: f32[128,128], index: 1, kind: input, shape index: {}]
  %s2 = inlined_call_operand.hbm [shape: f32[16,128], index: 2, kind: input, shape index: {}]
  %s3 = inlined_call_operand.hbm [shape: f32[16,128], index: 3, kind: input, shape index: {}]
  %s4 = inlined_call_operand.hbm [shape: f32[1,8,128], index: 4, kind: output, shape index: {}]
  %s5 = sld [smem:[#allocation0]]
  $region42: #{tpu_custom_call.1} parent=0
    _
  %s7 = ssub.s32 1, %s5
  %s8 = scalar_select 0, %s7, %s5
  $region1: #{tpu_custom_call.1} parent=0
    #allocation2 [shape = 'u8[8192]{0}', space=vmem, size = 0x2000, scoped, tag = 'input window, operand 0, single buffered']
    #allocation3 [shape = 's32[1]{0}', space=sflag, size = 0x4, scoped, tag = 'scoped memory for tpu_custom_call.1']
    #allocation4 [shape = 's32[1]{0}', space=sflag, size = 0x4, scoped, tag = 'scoped memory for tpu_custom_call.1']
    #allocation5 [shape = 'u8[65536]{0}', space=vmem, size = 0x10000, scoped, tag = 'input window, operand 1, single buffered']
    #allocation6 [shape = 's32[1]{0}', space=sflag, size = 0x4, scoped, tag = 'scoped memory for tpu_custom_call.1']
    #allocation7 [shape = 'u8[8192]{0}', space=vmem, size = 0x2000, scoped, tag = 'input window, operand 2, single buffered']
    #allocation8 [shape = 'u8[8192]{0}', space=vmem, size = 0x2000, scoped, tag = 'input window, operand 3, single buffered']
    #allocation9 [shape = 's32[1]{0}', space=sflag, size = 0x4, scoped, tag = 'scoped memory for tpu_custom_call.1']
    #allocation10 [shape = 'u8[4096]{0}', space=vmem, size = 0x1000, scoped, tag = 'output window, operand 0, single buffered']
    %9 = vsyncpa [#allocation3], 0
    %10 = vsyncpa [#allocation6], 0
    %11 = vsyncpa [#allocation9], 0
    %12 = vsyncpa [#allocation4], 0
    // Predicated region
    $region2: #{tpu_custom_call.1} parent=1 // pred_check
      _
    $region3: #{tpu_custom_call.1} parent=1 // pred_check_branch
      %14 = sbr.rel (0) target = $region5
    $region4: #{tpu_custom_call.1} parent=1 // pred_region
      %16 = vsyncadd [#allocation3], 0
      %s17 = sshll.u32 %s0, 4
      %s18 = int_to_ptr.hbm [resolvable:$true] %s17
      %s19 = sshll.u32 [#allocation2], 4
      %s20 = int_to_ptr.vmem [resolvable:$true] %s19
      %25 = dma.hbm_to_vmem [thread:$0]  %s18, 256, %s20, [#allocation3], 128, 128, 8
    $region5: #{tpu_custom_call.1} parent=1 // pred_fallthru
      _
    // Predicated region
    $region6: #{tpu_custom_call.1} parent=1 // pred_check
      _
    $region7: #{tpu_custom_call.1} parent=1 // pred_check_branch
      %27 = sbr.rel (0) target = $region9
    $region8: #{tpu_custom_call.1} parent=1 // pred_region
      %29 = vsyncadd [#allocation6], 0
      %s30 = sshll.u32 %s1, 4
      %s31 = int_to_ptr.hbm [resolvable:$true] %s30
      %s32 = sshll.u32 [#allocation5], 4
      %s33 = int_to_ptr.vmem [resolvable:$true] %s32
      %38 = dma.hbm_to_vmem [thread:$0]  %s31, 2048, %s33, [#allocation6], 128, 128, 8
    $region9: #{tpu_custom_call.1} parent=1 // pred_fallthru
      _
    // Predicated region
    $region10: #{tpu_custom_call.1} parent=1 // pred_check
      _
    $region11: #{tpu_custom_call.1} parent=1 // pred_check_branch
      %40 = sbr.rel (0) target = $region13
    $region12: #{tpu_custom_call.1} parent=1 // pred_region
      %42 = vsyncadd [#allocation6], 0
      %s43 = sshll.u32 %s2, 4
      %s44 = int_to_ptr.hbm [resolvable:$true] %s43
      %s45 = sshll.u32 [#allocation7], 4
      %s46 = int_to_ptr.vmem [resolvable:$true] %s45
      %51 = dma.hbm_to_vmem [thread:$0]  %s44, 256, %s46, [#allocation6], 128, 128, 8
    $region13: #{tpu_custom_call.1} parent=1 // pred_fallthru
      _
    // Predicated region
    $region14: #{tpu_custom_call.1} parent=1 // pred_check
      _
    $region15: #{tpu_custom_call.1} parent=1 // pred_check_branch
      %53 = sbr.rel (0) target = $region17
    $region16: #{tpu_custom_call.1} parent=1 // pred_region
      %55 = vsyncadd [#allocation9], 0
      %s56 = sshll.u32 %s3, 4
      %s57 = int_to_ptr.hbm [resolvable:$true] %s56
      %s58 = sshll.u32 [#allocation8], 4
      %s59 = int_to_ptr.vmem [resolvable:$true] %s58
      %64 = dma.hbm_to_vmem [thread:$0]  %s57, 256, %s59, [#allocation9], 128, 128, 8
    $region17: #{tpu_custom_call.1} parent=1 // pred_fallthru
      _
    // Predicated region
    $region18: #{tpu_custom_call.1} parent=1 // pred_check
      _
    $region19: #{tpu_custom_call.1} parent=1 // pred_check_branch
      %66 = sbr.rel (0) target = $region21
    $region20: #{tpu_custom_call.1} parent=1 // pred_region
      %68 = dma.done [#allocation3], 256
    $region21: #{tpu_custom_call.1} parent=1 // pred_fallthru
      _
    // Predicated region
    $region22: #{tpu_custom_call.1} parent=1 // pred_check
      _
    $region23: #{tpu_custom_call.1} parent=1 // pred_check_branch
      %70 = sbr.rel (0) target = $region25
    $region24: #{tpu_custom_call.1} parent=1 // pred_region
      %72 = dma.done [#allocation6], 2048
    $region25: #{tpu_custom_call.1} parent=1 // pred_fallthru
      _
    // Predicated region
    $region26: #{tpu_custom_call.1} parent=1 // pred_check
      _
    $region27: #{tpu_custom_call.1} parent=1 // pred_check_branch
      %74 = sbr.rel (0) target = $region29
    $region28: #{tpu_custom_call.1} parent=1 // pred_region
      %76 = dma.done [#allocation6], 256
    $region29: #{tpu_custom_call.1} parent=1 // pred_fallthru
      _
    // Predicated region
    $region30: #{tpu_custom_call.1} parent=1 // pred_check
      _
    $region31: #{tpu_custom_call.1} parent=1 // pred_check_branch
      %78 = sbr.rel (0) target = $region33
    $region32: #{tpu_custom_call.1} parent=1 // pred_region
      %80 = dma.done [#allocation9], 256
    $region33: #{tpu_custom_call.1} parent=1 // pred_fallthru
      _
    %v81 = vld [vmem:[#allocation2] sm:$0xff]
    %v82 = vld [vmem:[#allocation2 + $0x8] sm:$0xff]
    %v83 = vld [vmem:[#allocation5] sm:$0xff]
    %v84 = vld [vmem:[#allocation5 + $0x8] sm:$0xff]
    %v85 = vld [vmem:[#allocation5 + $0x10] sm:$0xff]
    %v86 = vld [vmem:[#allocation5 + $0x18] sm:$0xff]
    %v87 = vld [vmem:[#allocation5 + $0x20] sm:$0xff]
    %v88 = vld [vmem:[#allocation5 + $0x28] sm:$0xff]
    %v89 = vld [vmem:[#allocation5 + $0x30] sm:$0xff]
    %v90 = vld [vmem:[#allocation5 + $0x38] sm:$0xff]
    %v91 = vld [vmem:[#allocation5 + $0x40] sm:$0xff]
    %v92 = vld [vmem:[#allocation5 + $0x48] sm:$0xff]
    %v93 = vld [vmem:[#allocation5 + $0x50] sm:$0xff]
    %v94 = vld [vmem:[#allocation5 + $0x58] sm:$0xff]
    %v95 = vld [vmem:[#allocation5 + $0x60] sm:$0xff]
    %v96 = vld [vmem:[#allocation5 + $0x68] sm:$0xff]
    %v97 = vld [vmem:[#allocation5 + $0x70] sm:$0xff]
    %v98 = vld [vmem:[#allocation5 + $0x78] sm:$0xff]
    %v99 = vld [vmem:[#allocation7] sm:$0xff]
    %v100 = vld [vmem:[#allocation7 + $0x8] sm:$0xff]
    %v101 = vld [vmem:[#allocation8] sm:$0xff]
    %v102 = vld [vmem:[#allocation8 + $0x8] sm:$0xff]
    %v103 = vand.u32 %v98, 4294901760
    %104 = vmatpush.msra.mxu0 %v103
    %v105 = vand.u32 %v97, 4294901760
    %106 = vmatpush.msra.mxu0 %v105
    %v107 = vand.u32 %v96, 4294901760
    %108 = vmatpush.msra.mxu0 %v107
    %v109 = vand.u32 %v95, 4294901760
    %110 = vmatpush.msra.mxu0 %v109
    %v111 = vand.u32 %v94, 4294901760
    %112 = vmatpush.msra.mxu0 %v111
    %v113 = vand.u32 %v93, 4294901760
    %114 = vmatpush.msra.mxu0 %v113
    %v115 = vand.u32 %v92, 4294901760
    %116 = vmatpush.msra.mxu0 %v115
    %v117 = vand.u32 %v91, 4294901760
    %118 = vmatpush.msra.mxu0 %v117
    %v119 = vand.u32 %v90, 4294901760
    %120 = vmatpush.msra.mxu0 %v119
    %v121 = vand.u32 %v89, 4294901760
    %122 = vmatpush.msra.mxu0 %v121
    %v123 = vand.u32 %v88, 4294901760
    %124 = vmatpush.msra.mxu0 %v123
    %v125 = vand.u32 %v87, 4294901760
    %126 = vmatpush.msra.mxu0 %v125
    %v127 = vand.u32 %v86, 4294901760
    %128 = vmatpush.msra.mxu0 %v127
    %v129 = vand.u32 %v85, 4294901760
    %130 = vmatpush.msra.mxu0 %v129
    %v131 = vand.u32 %v84, 4294901760
    %132 = vmatpush.msra.mxu0 %v131
    %v133 = vand.u32 %v83, 4294901760
    %134 = vmatpush.msra.mxu0 %v133
    %v135 = vand.u32 %v99, 4294901760
    %v136 = vsub.f32 %v99, %v135
    %v137 = vand.u32 %v136, 4294901760
    %v138 = vsub.f32 %v136, %v137
    %v139 = vand.u32 %v138, 4294901760
    %140 = vmatmul.f32.gmra.mxu0 %v139
    %v141 = vpop.f32.mrf.mxu0
    %v142 = vadd.f32 0.0, %v141
    %v143 = vand.u32 %v100, 4294901760
    %v144 = vsub.f32 %v100, %v143
    %v145 = vand.u32 %v144, 4294901760
    %v146 = vsub.f32 %v144, %v145
    %v147 = vand.u32 %v146, 4294901760
    %148 = vmatmul.f32.gmra.mxu0 %v147
    %v149 = vpop.f32.mrf.mxu0
    %v150 = vadd.f32 0.0, %v149
    %151 = vdwg.mxu0
    %v152 = vand.u32 %v98, 4294901760
    %v153 = vsub.f32 %v98, %v152
    %v154 = vand.u32 %v153, 4294901760
    %v155 = vsub.f32 %v153, %v154
    %v156 = vand.u32 %v155, 4294901760
    %157 = vmatpush.msra.mxu0 %v156
    %v158 = vand.u32 %v97, 4294901760
    %v159 = vsub.f32 %v97, %v158
    %v160 = vand.u32 %v159, 4294901760
    %v161 = vsub.f32 %v159, %v160
    %v162 = vand.u32 %v161, 4294901760
    %163 = vmatpush.msra.mxu0 %v162
    %v164 = vand.u32 %v96, 4294901760
    %v165 = vsub.f32 %v96, %v164
    %v166 = vand.u32 %v165, 4294901760
    %v167 = vsub.f32 %v165, %v166
    %v168 = vand.u32 %v167, 4294901760
    %169 = vmatpush.msra.mxu0 %v168
    %v170 = vand.u32 %v95, 4294901760
    %v171 = vsub.f32 %v95, %v170
    %v172 = vand.u32 %v171, 4294901760
    %v173 = vsub.f32 %v171, %v172
    %v174 = vand.u32 %v173, 4294901760
    %175 = vmatpush.msra.mxu0 %v174
    %v176 = vand.u32 %v94, 4294901760
    %v177 = vsub.f32 %v94, %v176
    %v178 = vand.u32 %v177, 4294901760
    %v179 = vsub.f32 %v177, %v178
    %v180 = vand.u32 %v179, 4294901760
    %181 = vmatpush.msra.mxu0 %v180
    %v182 = vand.u32 %v93, 4294901760
    %v183 = vsub.f32 %v93, %v182
    %v184 = vand.u32 %v183, 4294901760
    %v185 = vsub.f32 %v183, %v184
    %v186 = vand.u32 %v185, 4294901760
    %187 = vmatpush.msra.mxu0 %v186
    %v188 = vand.u32 %v92, 4294901760
    %v189 = vsub.f32 %v92, %v188
    %v190 = vand.u32 %v189, 4294901760
    %v191 = vsub.f32 %v189, %v190
    %v192 = vand.u32 %v191, 4294901760
    %193 = vmatpush.msra.mxu0 %v192
    %v194 = vand.u32 %v91, 4294901760
    %v195 = vsub.f32 %v91, %v194
    %v196 = vand.u32 %v195, 4294901760
    %v197 = vsub.f32 %v195, %v196
    %v198 = vand.u32 %v197, 4294901760
    %199 = vmatpush.msra.mxu0 %v198
    %v200 = vand.u32 %v90, 4294901760
    %v201 = vsub.f32 %v90, %v200
    %v202 = vand.u32 %v201, 4294901760
    %v203 = vsub.f32 %v201, %v202
    %v204 = vand.u32 %v203, 4294901760
    %205 = vmatpush.msra.mxu0 %v204
    %v206 = vand.u32 %v89, 4294901760
    %v207 = vsub.f32 %v89, %v206
    %v208 = vand.u32 %v207, 4294901760
    %v209 = vsub.f32 %v207, %v208
    %v210 = vand.u32 %v209, 4294901760
    %211 = vmatpush.msra.mxu0 %v210
    %v212 = vand.u32 %v88, 4294901760
    %v213 = vsub.f32 %v88, %v212
    %v214 = vand.u32 %v213, 4294901760
    %v215 = vsub.f32 %v213, %v214
    %v216 = vand.u32 %v215, 4294901760
    %217 = vmatpush.msra.mxu0 %v216
    %v218 = vand.u32 %v87, 4294901760
    %v219 = vsub.f32 %v87, %v218
    %v220 = vand.u32 %v219, 4294901760
    %v221 = vsub.f32 %v219, %v220
    %v222 = vand.u32 %v221, 4294901760
    %223 = vmatpush.msra.mxu0 %v222
    %v224 = vand.u32 %v86, 4294901760
    %v225 = vsub.f32 %v86, %v224
    %v226 = vand.u32 %v225, 4294901760
    %v227 = vsub.f32 %v225, %v226
    %v228 = vand.u32 %v227, 4294901760
    %229 = vmatpush.msra.mxu0 %v228
    %v230 = vand.u32 %v85, 4294901760
    %v231 = vsub.f32 %v85, %v230
    %v232 = vand.u32 %v231, 4294901760
    %v233 = vsub.f32 %v231, %v232
    %v234 = vand.u32 %v233, 4294901760
    %235 = vmatpush.msra.mxu0 %v234
    %v236 = vand.u32 %v84, 4294901760
    %v237 = vsub.f32 %v84, %v236
    %v238 = vand.u32 %v237, 4294901760
    %v239 = vsub.f32 %v237, %v238
    %v240 = vand.u32 %v239, 4294901760
    %241 = vmatpush.msra.mxu0 %v240
    %v242 = vand.u32 %v83, 4294901760
    %v243 = vsub.f32 %v83, %v242
    %v244 = vand.u32 %v243, 4294901760
    %v245 = vsub.f32 %v243, %v244
    %v246 = vand.u32 %v245, 4294901760
    %247 = vmatpush.msra.mxu0 %v246
    %v248 = vand.u32 %v99, 4294901760
    %249 = vmatmul.f32.gmra.mxu0 %v248
    %v250 = vpop.f32.mrf.mxu0
    %v251 = vadd.f32 %v142, %v250
    %v252 = vand.u32 %v100, 4294901760
    %253 = vmatmul.f32.gmra.mxu0 %v252
    %v254 = vpop.f32.mrf.mxu0
    %v255 = vadd.f32 %v150, %v254
    %256 = vdwg.mxu0
    %v257 = vand.u32 %v98, 4294901760
    %v258 = vsub.f32 %v98, %v257
    %259 = vmatpush.msra.mxu0 %v258
    %v260 = vand.u32 %v97, 4294901760
    %v261 = vsub.f32 %v97, %v260
    %262 = vmatpush.msra.mxu0 %v261
    %v263 = vand.u32 %v96, 4294901760
    %v264 = vsub.f32 %v96, %v263
    %265 = vmatpush.msra.mxu0 %v264
    %v266 = vand.u32 %v95, 4294901760
    %v267 = vsub.f32 %v95, %v266
    %268 = vmatpush.msra.mxu0 %v267
    %v269 = vand.u32 %v94, 4294901760
    %v270 = vsub.f32 %v94, %v269
    %271 = vmatpush.msra.mxu0 %v270
    %v272 = vand.u32 %v93, 4294901760
    %v273 = vsub.f32 %v93, %v272
    %274 = vmatpush.msra.mxu0 %v273
    %v275 = vand.u32 %v92, 4294901760
    %v276 = vsub.f32 %v92, %v275
    %277 = vmatpush.msra.mxu0 %v276
    %v278 = vand.u32 %v91, 4294901760
    %v279 = vsub.f32 %v91, %v278
    %280 = vmatpush.msra.mxu0 %v279
    %v281 = vand.u32 %v90, 4294901760
    %v282 = vsub.f32 %v90, %v281
    %283 = vmatpush.msra.mxu0 %v282
    %v284 = vand.u32 %v89, 4294901760
    %v285 = vsub.f32 %v89, %v284
    %286 = vmatpush.msra.mxu0 %v285
    %v287 = vand.u32 %v88, 4294901760
    %v288 = vsub.f32 %v88, %v287
    %289 = vmatpush.msra.mxu0 %v288
    %v290 = vand.u32 %v87, 4294901760
    %v291 = vsub.f32 %v87, %v290
    %292 = vmatpush.msra.mxu0 %v291
    %v293 = vand.u32 %v86, 4294901760
    %v294 = vsub.f32 %v86, %v293
    %295 = vmatpush.msra.mxu0 %v294
    %v296 = vand.u32 %v85, 4294901760
    %v297 = vsub.f32 %v85, %v296
    %298 = vmatpush.msra.mxu0 %v297
    %v299 = vand.u32 %v84, 4294901760
    %v300 = vsub.f32 %v84, %v299
    %301 = vmatpush.msra.mxu0 %v300
    %v302 = vand.u32 %v83, 4294901760
    %v303 = vsub.f32 %v83, %v302
    %304 = vmatpush.msra.mxu0 %v303
    %v305 = vand.u32 %v99, 4294901760
    %v306 = vsub.f32 %v99, %v305
    %307 = vmatmul.f32.gmra.mxu0 %v306
    %v308 = vpop.f32.mrf.mxu0
    %v309 = vadd.f32 %v251, %v308
    %v310 = vand.u32 %v100, 4294901760
    %v311 = vsub.f32 %v100, %v310
    %312 = vmatmul.f32.gmra.mxu0 %v311
    %v313 = vpop.f32.mrf.mxu0
    %v314 = vadd.f32 %v255, %v313
    %315 = vdwg.mxu0
    %v316 = vand.u32 %v98, 4294901760
    %317 = vmatpush.msra.mxu0 %v316
    %v318 = vand.u32 %v97, 4294901760
    %319 = vmatpush.msra.mxu0 %v318
    %v320 = vand.u32 %v96, 4294901760
    %321 = vmatpush.msra.mxu0 %v320
    %v322 = vand.u32 %v95, 4294901760
    %323 = vmatpush.msra.mxu0 %v322
    %v324 = vand.u32 %v94, 4294901760
    %325 = vmatpush.msra.mxu0 %v324
    %v326 = vand.u32 %v93, 4294901760
    %327 = vmatpush.msra.mxu0 %v326
    %v328 = vand.u32 %v92, 4294901760
    %329 = vmatpush.msra.mxu0 %v328
    %v330 = vand.u32 %v91, 4294901760
    %331 = vmatpush.msra.mxu0 %v330
    %v332 = vand.u32 %v90, 4294901760
    %333 = vmatpush.msra.mxu0 %v332
    %v334 = vand.u32 %v89, 4294901760
    %335 = vmatpush.msra.mxu0 %v334
    %v336 = vand.u32 %v88, 4294901760
    %337 = vmatpush.msra.mxu0 %v336
    %v338 = vand.u32 %v87, 4294901760
    %339 = vmatpush.msra.mxu0 %v338
    %v340 = vand.u32 %v86, 4294901760
    %341 = vmatpush.msra.mxu0 %v340
    %v342 = vand.u32 %v85, 4294901760
    %343 = vmatpush.msra.mxu0 %v342
    %v344 = vand.u32 %v84, 4294901760
    %345 = vmatpush.msra.mxu0 %v344
    %v346 = vand.u32 %v83, 4294901760
    %347 = vmatpush.msra.mxu0 %v346
    %v348 = vand.u32 %v99, 4294901760
    %v349 = vsub.f32 %v99, %v348
    %v350 = vand.u32 %v349, 4294901760
    %351 = vmatmul.f32.gmra.mxu0 %v350
    %v352 = vpop.f32.mrf.mxu0
    %v353 = vadd.f32 %v309, %v352
    %v354 = vand.u32 %v100, 4294901760
    %v355 = vsub.f32 %v100, %v354
    %v356 = vand.u32 %v355, 4294901760
    %357 = vmatmul.f32.gmra.mxu0 %v356
    %v358 = vpop.f32.mrf.mxu0
    %v359 = vadd.f32 %v314, %v358
    %360 = vdwg.mxu0
    %v361 = vand.u32 %v98, 4294901760
    %v362 = vsub.f32 %v98, %v361
    %v363 = vand.u32 %v362, 4294901760
    %364 = vmatpush.msra.mxu0 %v363
    %v365 = vand.u32 %v97, 4294901760
    %v366 = vsub.f32 %v97, %v365
    %v367 = vand.u32 %v366, 4294901760
    %368 = vmatpush.msra.mxu0 %v367
    %v369 = vand.u32 %v96, 4294901760
    %v370 = vsub.f32 %v96, %v369
    %v371 = vand.u32 %v370, 4294901760
    %372 = vmatpush.msra.mxu0 %v371
    %v373 = vand.u32 %v95, 4294901760
    %v374 = vsub.f32 %v95, %v373
    %v375 = vand.u32 %v374, 4294901760
    %376 = vmatpush.msra.mxu0 %v375
    %v377 = vand.u32 %v94, 4294901760
    %v378 = vsub.f32 %v94, %v377
    %v379 = vand.u32 %v378, 4294901760
    %380 = vmatpush.msra.mxu0 %v379
    %v381 = vand.u32 %v93, 4294901760
    %v382 = vsub.f32 %v93, %v381
    %v383 = vand.u32 %v382, 4294901760
    %384 = vmatpush.msra.mxu0 %v383
    %v385 = vand.u32 %v92, 4294901760
    %v386 = vsub.f32 %v92, %v385
    %v387 = vand.u32 %v386, 4294901760
    %388 = vmatpush.msra.mxu0 %v387
    %v389 = vand.u32 %v91, 4294901760
    %v390 = vsub.f32 %v91, %v389
    %v391 = vand.u32 %v390, 4294901760
    %392 = vmatpush.msra.mxu0 %v391
    %v393 = vand.u32 %v90, 4294901760
    %v394 = vsub.f32 %v90, %v393
    %v395 = vand.u32 %v394, 4294901760
    %396 = vmatpush.msra.mxu0 %v395
    %v397 = vand.u32 %v89, 4294901760
    %v398 = vsub.f32 %v89, %v397
    %v399 = vand.u32 %v398, 4294901760
    %400 = vmatpush.msra.mxu0 %v399
    %v401 = vand.u32 %v88, 4294901760
    %v402 = vsub.f32 %v88, %v401
    %v403 = vand.u32 %v402, 4294901760
    %404 = vmatpush.msra.mxu0 %v403
    %v405 = vand.u32 %v87, 4294901760
    %v406 = vsub.f32 %v87, %v405
    %v407 = vand.u32 %v406, 4294901760
    %408 = vmatpush.msra.mxu0 %v407
    %v409 = vand.u32 %v86, 4294901760
    %v410 = vsub.f32 %v86, %v409
    %v411 = vand.u32 %v410, 4294901760
    %412 = vmatpush.msra.mxu0 %v411
    %v413 = vand.u32 %v85, 4294901760
    %v414 = vsub.f32 %v85, %v413
    %v415 = vand.u32 %v414, 4294901760
    %416 = vmatpush.msra.mxu0 %v415
    %v417 = vand.u32 %v84, 4294901760
    %v418 = vsub.f32 %v84, %v417
    %v419 = vand.u32 %v418, 4294901760
    %420 = vmatpush.msra.mxu0 %v419
    %v421 = vand.u32 %v83, 4294901760
    %v422 = vsub.f32 %v83, %v421
    %v423 = vand.u32 %v422, 4294901760
    %424 = vmatpush.msra.mxu0 %v423
    %v425 = vand.u32 %v99, 4294901760
    %426 = vmatmul.f32.gmra.mxu0 %v425
    %v427 = vpop.f32.mrf.mxu0
    %v428 = vadd.f32 %v353, %v427
    %v429 = vand.u32 %v100, 4294901760
    %430 = vmatmul.f32.gmra.mxu0 %v429
    %v431 = vpop.f32.mrf.mxu0
    %v432 = vadd.f32 %v359, %v431
    %433 = vdwg.mxu0
    %v434 = vand.u32 %v98, 4294901760
    %435 = vmatpush.msra.mxu0 %v434
    %v436 = vand.u32 %v97, 4294901760
    %437 = vmatpush.msra.mxu0 %v436
    %v438 = vand.u32 %v96, 4294901760
    %439 = vmatpush.msra.mxu0 %v438
    %v440 = vand.u32 %v95, 4294901760
    %441 = vmatpush.msra.mxu0 %v440
    %v442 = vand.u32 %v94, 4294901760
    %443 = vmatpush.msra.mxu0 %v442
    %v444 = vand.u32 %v93, 4294901760
    %445 = vmatpush.msra.mxu0 %v444
    %v446 = vand.u32 %v92, 4294901760
    %447 = vmatpush.msra.mxu0 %v446
    %v448 = vand.u32 %v91, 4294901760
    %449 = vmatpush.msra.mxu0 %v448
    %v450 = vand.u32 %v90, 4294901760
    %451 = vmatpush.msra.mxu0 %v450
    %v452 = vand.u32 %v89, 4294901760
    %453 = vmatpush.msra.mxu0 %v452
    %v454 = vand.u32 %v88, 4294901760
    %455 = vmatpush.msra.mxu0 %v454
    %v456 = vand.u32 %v87, 4294901760
    %457 = vmatpush.msra.mxu0 %v456
    %v458 = vand.u32 %v86, 4294901760
    %459 = vmatpush.msra.mxu0 %v458
    %v460 = vand.u32 %v85, 4294901760
    %461 = vmatpush.msra.mxu0 %v460
    %v462 = vand.u32 %v84, 4294901760
    %463 = vmatpush.msra.mxu0 %v462
    %v464 = vand.u32 %v83, 4294901760
    %465 = vmatpush.msra.mxu0 %v464
    %v466 = vand.u32 %v99, 4294901760
    %467 = vmatmul.f32.gmra.mxu0 %v466
    %v468 = vpop.f32.mrf.mxu0
    %v469 = vadd.f32 %v428, %v468
    %v470 = vand.u32 %v100, 4294901760
    %471 = vmatmul.f32.gmra.mxu0 %v470
    %v472 = vpop.f32.mrf.mxu0
    %v473 = vadd.f32 %v432, %v472
    %474 = vdwg.mxu0
    %vm475 = vcmask 130048
    %v477 = vsel %vm475, %v81, 0
    %v480 = vsel %vm475, %v82, 0
    %482 = vmatpush.msra.mxu0 0.0
    %483 = vmatpush.msra.mxu0 0.0
    %484 = vmatpush.msra.mxu0 0.0
    %485 = vmatpush.msra.mxu0 0.0
    %486 = vmatpush.msra.mxu0 0.0
    %487 = vmatpush.msra.mxu0 0.0
    %488 = vmatpush.msra.mxu0 0.0
    %489 = vmatpush.msra.mxu0 0.0
    %490 = vmatpush.msra.mxu0 0.0
    %491 = vmatpush.msra.mxu0 0.0
    %492 = vmatpush.msra.mxu0 0.0
    %493 = vmatpush.msra.mxu0 0.0
    %494 = vmatpush.msra.mxu0 0.0
    %495 = vmatpush.msra.mxu0 0.0
    %v496 = vand.u32 %v473, 4294901760
    %497 = vmatpush.msra.mxu0 %v496
    %v498 = vand.u32 %v469, 4294901760
    %499 = vmatpush.msra.mxu0 %v498
    %v500 = vand.u32 %v477, 4294901760
    %v501 = vsub.f32 %v477, %v500
    %v502 = vand.u32 %v501, 4294901760
    %v503 = vsub.f32 %v501, %v502
    %v504 = vand.u32 %v503, 4294901760
    %505 = vmatmul.f32.gmra.mxu0 %v504
    %v506 = vpop.f32.mrf.mxu0
    %v507 = vadd.f32 0.0, %v506
    %v508 = vand.u32 %v480, 4294901760
    %v509 = vsub.f32 %v480, %v508
    %v510 = vand.u32 %v509, 4294901760
    %v511 = vsub.f32 %v509, %v510
    %v512 = vand.u32 %v511, 4294901760
    %513 = vmatmul.f32.gmra.mxu0 %v512
    %v514 = vpop.f32.mrf.mxu0
    %v515 = vadd.f32 0.0, %v514
    %516 = vdwg.mxu0
    %517 = vmatpush.msra.mxu0 0.0
    %518 = vmatpush.msra.mxu0 0.0
    %519 = vmatpush.msra.mxu0 0.0
    %520 = vmatpush.msra.mxu0 0.0
    %521 = vmatpush.msra.mxu0 0.0
    %522 = vmatpush.msra.mxu0 0.0
    %523 = vmatpush.msra.mxu0 0.0
    %524 = vmatpush.msra.mxu0 0.0
    %525 = vmatpush.msra.mxu0 0.0
    %526 = vmatpush.msra.mxu0 0.0
    %527 = vmatpush.msra.mxu0 0.0
    %528 = vmatpush.msra.mxu0 0.0
    %529 = vmatpush.msra.mxu0 0.0
    %530 = vmatpush.msra.mxu0 0.0
    %v531 = vand.u32 %v473, 4294901760
    %v532 = vsub.f32 %v473, %v531
    %v533 = vand.u32 %v532, 4294901760
    %v534 = vsub.f32 %v532, %v533
    %v535 = vand.u32 %v534, 4294901760
    %536 = vmatpush.msra.mxu0 %v535
    %v537 = vand.u32 %v469, 4294901760
    %v538 = vsub.f32 %v469, %v537
    %v539 = vand.u32 %v538, 4294901760
    %v540 = vsub.f32 %v538, %v539
    %v541 = vand.u32 %v540, 4294901760
    %542 = vmatpush.msra.mxu0 %v541
    %v543 = vand.u32 %v477, 4294901760
    %544 = vmatmul.f32.gmra.mxu0 %v543
    %v545 = vpop.f32.mrf.mxu0
    %v546 = vadd.f32 %v507, %v545
    %v547 = vand.u32 %v480, 4294901760
    %548 = vmatmul.f32.gmra.mxu0 %v547
    %v549 = vpop.f32.mrf.mxu0
    %v550 = vadd.f32 %v515, %v549
    %551 = vdwg.mxu0
    %552 = vmatpush.msra.mxu0 0.0
    %553 = vmatpush.msra.mxu0 0.0
    %554 = vmatpush.msra.mxu0 0.0
    %555 = vmatpush.msra.mxu0 0.0
    %556 = vmatpush.msra.mxu0 0.0
    %557 = vmatpush.msra.mxu0 0.0
    %558 = vmatpush.msra.mxu0 0.0
    %559 = vmatpush.msra.mxu0 0.0
    %560 = vmatpush.msra.mxu0 0.0
    %561 = vmatpush.msra.mxu0 0.0
    %562 = vmatpush.msra.mxu0 0.0
    %563 = vmatpush.msra.mxu0 0.0
    %564 = vmatpush.msra.mxu0 0.0
    %565 = vmatpush.msra.mxu0 0.0
    %v566 = vand.u32 %v473, 4294901760
    %v567 = vsub.f32 %v473, %v566
    %568 = vmatpush.msra.mxu0 %v567
    %v569 = vand.u32 %v469, 4294901760
    %v570 = vsub.f32 %v469, %v569
    %571 = vmatpush.msra.mxu0 %v570
    %v572 = vand.u32 %v477, 4294901760
    %v573 = vsub.f32 %v477, %v572
    %574 = vmatmul.f32.gmra.mxu0 %v573
    %v575 = vpop.f32.mrf.mxu0
    %v576 = vadd.f32 %v546, %v575
    %v577 = vand.u32 %v480, 4294901760
    %v578 = vsub.f32 %v480, %v577
    %579 = vmatmul.f32.gmra.mxu0 %v578
    %v580 = vpop.f32.mrf.mxu0
    %v581 = vadd.f32 %v550, %v580
    %582 = vdwg.mxu0
    %583 = vmatpush.msra.mxu0 0.0
    %584 = vmatpush.msra.mxu0 0.0
    %585 = vmatpush.msra.mxu0 0.0
    %586 = vmatpush.msra.mxu0 0.0
    %587 = vmatpush.msra.mxu0 0.0
    %588 = vmatpush.msra.mxu0 0.0
    %589 = vmatpush.msra.mxu0 0.0
    %590 = vmatpush.msra.mxu0 0.0
    %591 = vmatpush.msra.mxu0 0.0
    %592 = vmatpush.msra.mxu0 0.0
    %593 = vmatpush.msra.mxu0 0.0
    %594 = vmatpush.msra.mxu0 0.0
    %595 = vmatpush.msra.mxu0 0.0
    %596 = vmatpush.msra.mxu0 0.0
    %v597 = vand.u32 %v473, 4294901760
    %598 = vmatpush.msra.mxu0 %v597
    %v599 = vand.u32 %v469, 4294901760
    %600 = vmatpush.msra.mxu0 %v599
    %v601 = vand.u32 %v477, 4294901760
    %v602 = vsub.f32 %v477, %v601
    %v603 = vand.u32 %v602, 4294901760
    %604 = vmatmul.f32.gmra.mxu0 %v603
    %v605 = vpop.f32.mrf.mxu0
    %v606 = vadd.f32 %v576, %v605
    %v607 = vand.u32 %v480, 4294901760
    %v608 = vsub.f32 %v480, %v607
    %v609 = vand.u32 %v608, 4294901760
    %610 = vmatmul.f32.gmra.mxu0 %v609
    %v611 = vpop.f32.mrf.mxu0
    %v612 = vadd.f32 %v581, %v611
    %613 = vdwg.mxu0
    %614 = vmatpush.msra.mxu0 0.0
    %615 = vmatpush.msra.mxu0 0.0
    %616 = vmatpush.msra.mxu0 0.0
    %617 = vmatpush.msra.mxu0 0.0
    %618 = vmatpush.msra.mxu0 0.0
    %619 = vmatpush.msra.mxu0 0.0
    %620 = vmatpush.msra.mxu0 0.0
    %621 = vmatpush.msra.mxu0 0.0
    %622 = vmatpush.msra.mxu0 0.0
    %623 = vmatpush.msra.mxu0 0.0
    %624 = vmatpush.msra.mxu0 0.0
    %625 = vmatpush.msra.mxu0 0.0
    %626 = vmatpush.msra.mxu0 0.0
    %627 = vmatpush.msra.mxu0 0.0
    %v628 = vand.u32 %v473, 4294901760
    %v629 = vsub.f32 %v473, %v628
    %v630 = vand.u32 %v629, 4294901760
    %631 = vmatpush.msra.mxu0 %v630
    %v632 = vand.u32 %v469, 4294901760
    %v633 = vsub.f32 %v469, %v632
    %v634 = vand.u32 %v633, 4294901760
    %635 = vmatpush.msra.mxu0 %v634
    %v636 = vand.u32 %v477, 4294901760
    %637 = vmatmul.f32.gmra.mxu0 %v636
    %v638 = vpop.f32.mrf.mxu0
    %v639 = vadd.f32 %v606, %v638
    %v640 = vand.u32 %v480, 4294901760
    %641 = vmatmul.f32.gmra.mxu0 %v640
    %v642 = vpop.f32.mrf.mxu0
    %v643 = vadd.f32 %v612, %v642
    %644 = vdwg.mxu0
    %645 = vmatpush.msra.mxu0 0.0
    %646 = vmatpush.msra.mxu0 0.0
    %647 = vmatpush.msra.mxu0 0.0
    %648 = vmatpush.msra.mxu0 0.0
    %649 = vmatpush.msra.mxu0 0.0
    %650 = vmatpush.msra.mxu0 0.0
    %651 = vmatpush.msra.mxu0 0.0
    %652 = vmatpush.msra.mxu0 0.0
    %653 = vmatpush.msra.mxu0 0.0
    %654 = vmatpush.msra.mxu0 0.0
    %655 = vmatpush.msra.mxu0 0.0
    %656 = vmatpush.msra.mxu0 0.0
    %657 = vmatpush.msra.mxu0 0.0
    %658 = vmatpush.msra.mxu0 0.0
    %v659 = vand.u32 %v473, 4294901760
    %660 = vmatpush.msra.mxu0 %v659
    %v661 = vand.u32 %v469, 4294901760
    %662 = vmatpush.msra.mxu0 %v661
    %v663 = vand.u32 %v477, 4294901760
    %664 = vmatmul.f32.gmra.mxu0 %v663
    %v665 = vpop.f32.mrf.mxu0
    %v666 = vadd.f32 %v639, %v665
    %v667 = vand.u32 %v480, 4294901760
    %668 = vmatmul.f32.gmra.mxu0 %v667
    %v669 = vpop.f32.mrf.mxu0
    %v670 = vadd.f32 %v643, %v669
    %671 = vdwg.mxu0
    %v672 = vand.u32 %v98, 4294901760
    %673 = vmatpush.msra.mxu0 %v672
    %v674 = vand.u32 %v97, 4294901760
    %675 = vmatpush.msra.mxu0 %v674
    %v676 = vand.u32 %v96, 4294901760
    %677 = vmatpush.msra.mxu0 %v676
    %v678 = vand.u32 %v95, 4294901760
    %679 = vmatpush.msra.mxu0 %v678
    %v680 = vand.u32 %v94, 4294901760
    %681 = vmatpush.msra.mxu0 %v680
    %v682 = vand.u32 %v93, 4294901760
    %683 = vmatpush.msra.mxu0 %v682
    %v684 = vand.u32 %v92, 4294901760
    %685 = vmatpush.msra.mxu0 %v684
    %v686 = vand.u32 %v91, 4294901760
    %687 = vmatpush.msra.mxu0 %v686
    %v688 = vand.u32 %v90, 4294901760
    %689 = vmatpush.msra.mxu0 %v688
    %v690 = vand.u32 %v89, 4294901760
    %691 = vmatpush.msra.mxu0 %v690
    %v692 = vand.u32 %v88, 4294901760
    %693 = vmatpush.msra.mxu0 %v692
    %v694 = vand.u32 %v87, 4294901760
    %695 = vmatpush.msra.mxu0 %v694
    %v696 = vand.u32 %v86, 4294901760
    %697 = vmatpush.msra.mxu0 %v696
    %v698 = vand.u32 %v85, 4294901760
    %699 = vmatpush.msra.mxu0 %v698
    %v700 = vand.u32 %v84, 4294901760
    %701 = vmatpush.msra.mxu0 %v700
    %v702 = vand.u32 %v83, 4294901760
    %703 = vmatpush.msra.mxu0 %v702
    %v704 = vand.u32 %v101, 4294901760
    %v705 = vsub.f32 %v101, %v704
    %v706 = vand.u32 %v705, 4294901760
    %v707 = vsub.f32 %v705, %v706
    %v708 = vand.u32 %v707, 4294901760
    %709 = vmatmul.f32.gmra.mxu0 %v708
    %v710 = vpop.f32.mrf.mxu0
    %v711 = vadd.f32 0.0, %v710
    %v712 = vand.u32 %v102, 4294901760
    %v713 = vsub.f32 %v102, %v712
    %v714 = vand.u32 %v713, 4294901760
    %v715 = vsub.f32 %v713, %v714
    %v716 = vand.u32 %v715, 4294901760
    %717 = vmatmul.f32.gmra.mxu0 %v716
    %v718 = vpop.f32.mrf.mxu0
    %v719 = vadd.f32 0.0, %v718
    %720 = vdwg.mxu0
    %v721 = vand.u32 %v98, 4294901760
    %v722 = vsub.f32 %v98, %v721
    %v723 = vand.u32 %v722, 4294901760
    %v724 = vsub.f32 %v722, %v723
    %v725 = vand.u32 %v724, 4294901760
    %726 = vmatpush.msra.mxu0 %v725
    %v727 = vand.u32 %v97, 4294901760
    %v728 = vsub.f32 %v97, %v727
    %v729 = vand.u32 %v728, 4294901760
    %v730 = vsub.f32 %v728, %v729
    %v731 = vand.u32 %v730, 4294901760
    %732 = vmatpush.msra.mxu0 %v731
    %v733 = vand.u32 %v96, 4294901760
    %v734 = vsub.f32 %v96, %v733
    %v735 = vand.u32 %v734, 4294901760
    %v736 = vsub.f32 %v734, %v735
    %v737 = vand.u32 %v736, 4294901760
    %738 = vmatpush.msra.mxu0 %v737
    %v739 = vand.u32 %v95, 4294901760
    %v740 = vsub.f32 %v95, %v739
    %v741 = vand.u32 %v740, 4294901760
    %v742 = vsub.f32 %v740, %v741
    %v743 = vand.u32 %v742, 4294901760
    %744 = vmatpush.msra.mxu0 %v743
    %v745 = vand.u32 %v94, 4294901760
    %v746 = vsub.f32 %v94, %v745
    %v747 = vand.u32 %v746, 4294901760
    %v748 = vsub.f32 %v746, %v747
    %v749 = vand.u32 %v748, 4294901760
    %750 = vmatpush.msra.mxu0 %v749
    %v751 = vand.u32 %v93, 4294901760
    %v752 = vsub.f32 %v93, %v751
    %v753 = vand.u32 %v752, 4294901760
    %v754 = vsub.f32 %v752, %v753
    %v755 = vand.u32 %v754, 4294901760
    %756 = vmatpush.msra.mxu0 %v755
    %v757 = vand.u32 %v92, 4294901760
    %v758 = vsub.f32 %v92, %v757
    %v759 = vand.u32 %v758, 4294901760
    %v760 = vsub.f32 %v758, %v759
    %v761 = vand.u32 %v760, 4294901760
    %762 = vmatpush.msra.mxu0 %v761
    %v763 = vand.u32 %v91, 4294901760
    %v764 = vsub.f32 %v91, %v763
    %v765 = vand.u32 %v764, 4294901760
    %v766 = vsub.f32 %v764, %v765
    %v767 = vand.u32 %v766, 4294901760
    %768 = vmatpush.msra.mxu0 %v767
    %v769 = vand.u32 %v90, 4294901760
    %v770 = vsub.f32 %v90, %v769
    %v771 = vand.u32 %v770, 4294901760
    %v772 = vsub.f32 %v770, %v771
    %v773 = vand.u32 %v772, 4294901760
    %774 = vmatpush.msra.mxu0 %v773
    %v775 = vand.u32 %v89, 4294901760
    %v776 = vsub.f32 %v89, %v775
    %v777 = vand.u32 %v776, 4294901760
    %v778 = vsub.f32 %v776, %v777
    %v779 = vand.u32 %v778, 4294901760
    %780 = vmatpush.msra.mxu0 %v779
    %v781 = vand.u32 %v88, 4294901760
    %v782 = vsub.f32 %v88, %v781
    %v783 = vand.u32 %v782, 4294901760
    %v784 = vsub.f32 %v782, %v783
    %v785 = vand.u32 %v784, 4294901760
    %786 = vmatpush.msra.mxu0 %v785
    %v787 = vand.u32 %v87, 4294901760
    %v788 = vsub.f32 %v87, %v787
    %v789 = vand.u32 %v788, 4294901760
    %v790 = vsub.f32 %v788, %v789
    %v791 = vand.u32 %v790, 4294901760
    %792 = vmatpush.msra.mxu0 %v791
    %v793 = vand.u32 %v86, 4294901760
    %v794 = vsub.f32 %v86, %v793
    %v795 = vand.u32 %v794, 4294901760
    %v796 = vsub.f32 %v794, %v795
    %v797 = vand.u32 %v796, 4294901760
    %798 = vmatpush.msra.mxu0 %v797
    %v799 = vand.u32 %v85, 4294901760
    %v800 = vsub.f32 %v85, %v799
    %v801 = vand.u32 %v800, 4294901760
    %v802 = vsub.f32 %v800, %v801
    %v803 = vand.u32 %v802, 4294901760
    %804 = vmatpush.msra.mxu0 %v803
    %v805 = vand.u32 %v84, 4294901760
    %v806 = vsub.f32 %v84, %v805
    %v807 = vand.u32 %v806, 4294901760
    %v808 = vsub.f32 %v806, %v807
    %v809 = vand.u32 %v808, 4294901760
    %810 = vmatpush.msra.mxu0 %v809
    %v811 = vand.u32 %v83, 4294901760
    %v812 = vsub.f32 %v83, %v811
    %v813 = vand.u32 %v812, 4294901760
    %v814 = vsub.f32 %v812, %v813
    %v815 = vand.u32 %v814, 4294901760
    %816 = vmatpush.msra.mxu0 %v815
    %v817 = vand.u32 %v101, 4294901760
    %818 = vmatmul.f32.gmra.mxu0 %v817
    %v819 = vpop.f32.mrf.mxu0
    %v820 = vadd.f32 %v711, %v819
    %v821 = vand.u32 %v102, 4294901760
    %822 = vmatmul.f32.gmra.mxu0 %v821
    %v823 = vpop.f32.mrf.mxu0
    %v824 = vadd.f32 %v719, %v823
    %825 = vdwg.mxu0
    %v826 = vand.u32 %v98, 4294901760
    %v827 = vsub.f32 %v98, %v826
    %828 = vmatpush.msra.mxu0 %v827
    %v829 = vand.u32 %v97, 4294901760
    %v830 = vsub.f32 %v97, %v829
    %831 = vmatpush.msra.mxu0 %v830
    %v832 = vand.u32 %v96, 4294901760
    %v833 = vsub.f32 %v96, %v832
    %834 = vmatpush.msra.mxu0 %v833
    %v835 = vand.u32 %v95, 4294901760
    %v836 = vsub.f32 %v95, %v835
    %837 = vmatpush.msra.mxu0 %v836
    %v838 = vand.u32 %v94, 4294901760
    %v839 = vsub.f32 %v94, %v838
    %840 = vmatpush.msra.mxu0 %v839
    %v841 = vand.u32 %v93, 4294901760
    %v842 = vsub.f32 %v93, %v841
    %843 = vmatpush.msra.mxu0 %v842
    %v844 = vand.u32 %v92, 4294901760
    %v845 = vsub.f32 %v92, %v844
    %846 = vmatpush.msra.mxu0 %v845
    %v847 = vand.u32 %v91, 4294901760
    %v848 = vsub.f32 %v91, %v847
    %849 = vmatpush.msra.mxu0 %v848
    %v850 = vand.u32 %v90, 4294901760
    %v851 = vsub.f32 %v90, %v850
    %852 = vmatpush.msra.mxu0 %v851
    %v853 = vand.u32 %v89, 4294901760
    %v854 = vsub.f32 %v89, %v853
    %855 = vmatpush.msra.mxu0 %v854
    %v856 = vand.u32 %v88, 4294901760
    %v857 = vsub.f32 %v88, %v856
    %858 = vmatpush.msra.mxu0 %v857
    %v859 = vand.u32 %v87, 4294901760
    %v860 = vsub.f32 %v87, %v859
    %861 = vmatpush.msra.mxu0 %v860
    %v862 = vand.u32 %v86, 4294901760
    %v863 = vsub.f32 %v86, %v862
    %864 = vmatpush.msra.mxu0 %v863
    %v865 = vand.u32 %v85, 4294901760
    %v866 = vsub.f32 %v85, %v865
    %867 = vmatpush.msra.mxu0 %v866
    %v868 = vand.u32 %v84, 4294901760
    %v869 = vsub.f32 %v84, %v868
    %870 = vmatpush.msra.mxu0 %v869
    %v871 = vand.u32 %v83, 4294901760
    %v872 = vsub.f32 %v83, %v871
    %873 = vmatpush.msra.mxu0 %v872
    %v874 = vand.u32 %v101, 4294901760
    %v875 = vsub.f32 %v101, %v874
    %876 = vmatmul.f32.gmra.mxu0 %v875
    %v877 = vpop.f32.mrf.mxu0
    %v878 = vadd.f32 %v820, %v877
    %v879 = vand.u32 %v102, 4294901760
    %v880 = vsub.f32 %v102, %v879
    %881 = vmatmul.f32.gmra.mxu0 %v880
    %v882 = vpop.f32.mrf.mxu0
    %v883 = vadd.f32 %v824, %v882
    %884 = vdwg.mxu0
    %v885 = vand.u32 %v98, 4294901760
    %886 = vmatpush.msra.mxu0 %v885
    %v887 = vand.u32 %v97, 4294901760
    %888 = vmatpush.msra.mxu0 %v887
    %v889 = vand.u32 %v96, 4294901760
    %890 = vmatpush.msra.mxu0 %v889
    %v891 = vand.u32 %v95, 4294901760
    %892 = vmatpush.msra.mxu0 %v891
    %v893 = vand.u32 %v94, 4294901760
    %894 = vmatpush.msra.mxu0 %v893
    %v895 = vand.u32 %v93, 4294901760
    %896 = vmatpush.msra.mxu0 %v895
    %v897 = vand.u32 %v92, 4294901760
    %898 = vmatpush.msra.mxu0 %v897
    %v899 = vand.u32 %v91, 4294901760
    %900 = vmatpush.msra.mxu0 %v899
    %v901 = vand.u32 %v90, 4294901760
    %902 = vmatpush.msra.mxu0 %v901
    %v903 = vand.u32 %v89, 4294901760
    %904 = vmatpush.msra.mxu0 %v903
    %v905 = vand.u32 %v88, 4294901760
    %906 = vmatpush.msra.mxu0 %v905
    %v907 = vand.u32 %v87, 4294901760
    %908 = vmatpush.msra.mxu0 %v907
    %v909 = vand.u32 %v86, 4294901760
    %910 = vmatpush.msra.mxu0 %v909
    %v911 = vand.u32 %v85, 4294901760
    %912 = vmatpush.msra.mxu0 %v911
    %v913 = vand.u32 %v84, 4294901760
    %914 = vmatpush.msra.mxu0 %v913
    %v915 = vand.u32 %v83, 4294901760
    %916 = vmatpush.msra.mxu0 %v915
    %v917 = vand.u32 %v101, 4294901760
    %v918 = vsub.f32 %v101, %v917
    %v919 = vand.u32 %v918, 4294901760
    %920 = vmatmul.f32.gmra.mxu0 %v919
    %v921 = vpop.f32.mrf.mxu0
    %v922 = vadd.f32 %v878, %v921
    %v923 = vand.u32 %v102, 4294901760
    %v924 = vsub.f32 %v102, %v923
    %v925 = vand.u32 %v924, 4294901760
    %926 = vmatmul.f32.gmra.mxu0 %v925
    %v927 = vpop.f32.mrf.mxu0
    %v928 = vadd.f32 %v883, %v927
    %929 = vdwg.mxu0
    %v930 = vand.u32 %v98, 4294901760
    %v931 = vsub.f32 %v98, %v930
    %v932 = vand.u32 %v931, 4294901760
    %933 = vmatpush.msra.mxu0 %v932
    %v934 = vand.u32 %v97, 4294901760
    %v935 = vsub.f32 %v97, %v934
    %v936 = vand.u32 %v935, 4294901760
    %937 = vmatpush.msra.mxu0 %v936
    %v938 = vand.u32 %v96, 4294901760
    %v939 = vsub.f32 %v96, %v938
    %v940 = vand.u32 %v939, 4294901760
    %941 = vmatpush.msra.mxu0 %v940
    %v942 = vand.u32 %v95, 4294901760
    %v943 = vsub.f32 %v95, %v942
    %v944 = vand.u32 %v943, 4294901760
    %945 = vmatpush.msra.mxu0 %v944
    %v946 = vand.u32 %v94, 4294901760
    %v947 = vsub.f32 %v94, %v946
    %v948 = vand.u32 %v947, 4294901760
    %949 = vmatpush.msra.mxu0 %v948
    %v950 = vand.u32 %v93, 4294901760
    %v951 = vsub.f32 %v93, %v950
    %v952 = vand.u32 %v951, 4294901760
    %953 = vmatpush.msra.mxu0 %v952
    %v954 = vand.u32 %v92, 4294901760
    %v955 = vsub.f32 %v92, %v954
    %v956 = vand.u32 %v955, 4294901760
    %957 = vmatpush.msra.mxu0 %v956
    %v958 = vand.u32 %v91, 4294901760
    %v959 = vsub.f32 %v91, %v958
    %v960 = vand.u32 %v959, 4294901760
    %961 = vmatpush.msra.mxu0 %v960
    %v962 = vand.u32 %v90, 4294901760
    %v963 = vsub.f32 %v90, %v962
    %v964 = vand.u32 %v963, 4294901760
    %965 = vmatpush.msra.mxu0 %v964
    %v966 = vand.u32 %v89, 4294901760
    %v967 = vsub.f32 %v89, %v966
    %v968 = vand.u32 %v967, 4294901760
    %969 = vmatpush.msra.mxu0 %v968
    %v970 = vand.u32 %v88, 4294901760
    %v971 = vsub.f32 %v88, %v970
    %v972 = vand.u32 %v971, 4294901760
    %973 = vmatpush.msra.mxu0 %v972
    %v974 = vand.u32 %v87, 4294901760
    %v975 = vsub.f32 %v87, %v974
    %v976 = vand.u32 %v975, 4294901760
    %977 = vmatpush.msra.mxu0 %v976
    %v978 = vand.u32 %v86, 4294901760
    %v979 = vsub.f32 %v86, %v978
    %v980 = vand.u32 %v979, 4294901760
    %981 = vmatpush.msra.mxu0 %v980
    %v982 = vand.u32 %v85, 4294901760
    %v983 = vsub.f32 %v85, %v982
    %v984 = vand.u32 %v983, 4294901760
    %985 = vmatpush.msra.mxu0 %v984
    %v986 = vand.u32 %v84, 4294901760
    %v987 = vsub.f32 %v84, %v986
    %v988 = vand.u32 %v987, 4294901760
    %989 = vmatpush.msra.mxu0 %v988
    %v990 = vand.u32 %v83, 4294901760
    %v991 = vsub.f32 %v83, %v990
    %v992 = vand.u32 %v991, 4294901760
    %993 = vmatpush.msra.mxu0 %v992
    %v994 = vand.u32 %v101, 4294901760
    %995 = vmatmul.f32.gmra.mxu0 %v994
    %v996 = vpop.f32.mrf.mxu0
    %v997 = vadd.f32 %v922, %v996
    %v998 = vand.u32 %v102, 4294901760
    %999 = vmatmul.f32.gmra.mxu0 %v998
    %v1000 = vpop.f32.mrf.mxu0
    %v1001 = vadd.f32 %v928, %v1000
    %1002 = vdwg.mxu0
    %v1003 = vand.u32 %v98, 4294901760
    %1004 = vmatpush.msra.mxu0 %v1003
    %v1005 = vand.u32 %v97, 4294901760
    %1006 = vmatpush.msra.mxu0 %v1005
    %v1007 = vand.u32 %v96, 4294901760
    %1008 = vmatpush.msra.mxu0 %v1007
    %v1009 = vand.u32 %v95, 4294901760
    %1010 = vmatpush.msra.mxu0 %v1009
    %v1011 = vand.u32 %v94, 4294901760
    %1012 = vmatpush.msra.mxu0 %v1011
    %v1013 = vand.u32 %v93, 4294901760
    %1014 = vmatpush.msra.mxu0 %v1013
    %v1015 = vand.u32 %v92, 4294901760
    %1016 = vmatpush.msra.mxu0 %v1015
    %v1017 = vand.u32 %v91, 4294901760
    %1018 = vmatpush.msra.mxu0 %v1017
    %v1019 = vand.u32 %v90, 4294901760
    %1020 = vmatpush.msra.mxu0 %v1019
    %v1021 = vand.u32 %v89, 4294901760
    %1022 = vmatpush.msra.mxu0 %v1021
    %v1023 = vand.u32 %v88, 4294901760
    %1024 = vmatpush.msra.mxu0 %v1023
    %v1025 = vand.u32 %v87, 4294901760
    %1026 = vmatpush.msra.mxu0 %v1025
    %v1027 = vand.u32 %v86, 4294901760
    %1028 = vmatpush.msra.mxu0 %v1027
    %v1029 = vand.u32 %v85, 4294901760
    %1030 = vmatpush.msra.mxu0 %v1029
    %v1031 = vand.u32 %v84, 4294901760
    %1032 = vmatpush.msra.mxu0 %v1031
    %v1033 = vand.u32 %v83, 4294901760
    %1034 = vmatpush.msra.mxu0 %v1033
    %v1035 = vand.u32 %v101, 4294901760
    %1036 = vmatmul.f32.gmra.mxu0 %v1035
    %v1037 = vpop.f32.mrf.mxu0
    %v1038 = vadd.f32 %v997, %v1037
    %v1039 = vand.u32 %v102, 4294901760
    %1040 = vmatmul.f32.gmra.mxu0 %v1039
    %v1041 = vpop.f32.mrf.mxu0
    %v1042 = vadd.f32 %v1001, %v1041
    %1043 = vdwg.mxu0
    %1044 = vmatpush.msra.mxu0 0.0
    %1045 = vmatpush.msra.mxu0 0.0
    %1046 = vmatpush.msra.mxu0 0.0
    %1047 = vmatpush.msra.mxu0 0.0
    %1048 = vmatpush.msra.mxu0 0.0
    %1049 = vmatpush.msra.mxu0 0.0
    %1050 = vmatpush.msra.mxu0 0.0
    %1051 = vmatpush.msra.mxu0 0.0
    %1052 = vmatpush.msra.mxu0 0.0
    %1053 = vmatpush.msra.mxu0 0.0
    %1054 = vmatpush.msra.mxu0 0.0
    %1055 = vmatpush.msra.mxu0 0.0
    %1056 = vmatpush.msra.mxu0 0.0
    %1057 = vmatpush.msra.mxu0 0.0
    %v1058 = vand.u32 %v1042, 4294901760
    %1059 = vmatpush.msra.mxu0 %v1058
    %v1060 = vand.u32 %v1038, 4294901760
    %1061 = vmatpush.msra.mxu0 %v1060
    %v1062 = vand.u32 %v477, 4294901760
    %v1063 = vsub.f32 %v477, %v1062
    %v1064 = vand.u32 %v1063, 4294901760
    %v1065 = vsub.f32 %v1063, %v1064
    %v1066 = vand.u32 %v1065, 4294901760
    %1067 = vmatmul.f32.gmra.mxu0 %v1066
    %v1068 = vpop.f32.mrf.mxu0
    %v1069 = vadd.f32 0.0, %v1068
    %v1070 = vand.u32 %v480, 4294901760
    %v1071 = vsub.f32 %v480, %v1070
    %v1072 = vand.u32 %v1071, 4294901760
    %v1073 = vsub.f32 %v1071, %v1072
    %v1074 = vand.u32 %v1073, 4294901760
    %1075 = vmatmul.f32.gmra.mxu0 %v1074
    %v1076 = vpop.f32.mrf.mxu0
    %v1077 = vadd.f32 0.0, %v1076
    %1078 = vdwg.mxu0
    %1079 = vmatpush.msra.mxu0 0.0
    %1080 = vmatpush.msra.mxu0 0.0
    %1081 = vmatpush.msra.mxu0 0.0
    %1082 = vmatpush.msra.mxu0 0.0
    %1083 = vmatpush.msra.mxu0 0.0
    %1084 = vmatpush.msra.mxu0 0.0
    %1085 = vmatpush.msra.mxu0 0.0
    %1086 = vmatpush.msra.mxu0 0.0
    %1087 = vmatpush.msra.mxu0 0.0
    %1088 = vmatpush.msra.mxu0 0.0
    %1089 = vmatpush.msra.mxu0 0.0
    %1090 = vmatpush.msra.mxu0 0.0
    %1091 = vmatpush.msra.mxu0 0.0
    %1092 = vmatpush.msra.mxu0 0.0
    %v1093 = vand.u32 %v1042, 4294901760
    %v1094 = vsub.f32 %v1042, %v1093
    %v1095 = vand.u32 %v1094, 4294901760
    %v1096 = vsub.f32 %v1094, %v1095
    %v1097 = vand.u32 %v1096, 4294901760
    %1098 = vmatpush.msra.mxu0 %v1097
    %v1099 = vand.u32 %v1038, 4294901760
    %v1100 = vsub.f32 %v1038, %v1099
    %v1101 = vand.u32 %v1100, 4294901760
    %v1102 = vsub.f32 %v1100, %v1101
    %v1103 = vand.u32 %v1102, 4294901760
    %1104 = vmatpush.msra.mxu0 %v1103
    %v1105 = vand.u32 %v477, 4294901760
    %1106 = vmatmul.f32.gmra.mxu0 %v1105
    %v1107 = vpop.f32.mrf.mxu0
    %v1108 = vadd.f32 %v1069, %v1107
    %v1109 = vand.u32 %v480, 4294901760
    %1110 = vmatmul.f32.gmra.mxu0 %v1109
    %v1111 = vpop.f32.mrf.mxu0
    %v1112 = vadd.f32 %v1077, %v1111
    %1113 = vdwg.mxu0
    %1114 = vmatpush.msra.mxu0 0.0
    %1115 = vmatpush.msra.mxu0 0.0
    %1116 = vmatpush.msra.mxu0 0.0
    %1117 = vmatpush.msra.mxu0 0.0
    %1118 = vmatpush.msra.mxu0 0.0
    %1119 = vmatpush.msra.mxu0 0.0
    %1120 = vmatpush.msra.mxu0 0.0
    %1121 = vmatpush.msra.mxu0 0.0
    %1122 = vmatpush.msra.mxu0 0.0
    %1123 = vmatpush.msra.mxu0 0.0
    %1124 = vmatpush.msra.mxu0 0.0
    %1125 = vmatpush.msra.mxu0 0.0
    %1126 = vmatpush.msra.mxu0 0.0
    %1127 = vmatpush.msra.mxu0 0.0
    %v1128 = vand.u32 %v1042, 4294901760
    %v1129 = vsub.f32 %v1042, %v1128
    %1130 = vmatpush.msra.mxu0 %v1129
    %v1131 = vand.u32 %v1038, 4294901760
    %v1132 = vsub.f32 %v1038, %v1131
    %1133 = vmatpush.msra.mxu0 %v1132
    %v1134 = vand.u32 %v477, 4294901760
    %v1135 = vsub.f32 %v477, %v1134
    %1136 = vmatmul.f32.gmra.mxu0 %v1135
    %v1137 = vpop.f32.mrf.mxu0
    %v1138 = vadd.f32 %v1108, %v1137
    %v1139 = vand.u32 %v480, 4294901760
    %v1140 = vsub.f32 %v480, %v1139
    %1141 = vmatmul.f32.gmra.mxu0 %v1140
    %v1142 = vpop.f32.mrf.mxu0
    %v1143 = vadd.f32 %v1112, %v1142
    %1144 = vdwg.mxu0
    %1145 = vmatpush.msra.mxu0 0.0
    %1146 = vmatpush.msra.mxu0 0.0
    %1147 = vmatpush.msra.mxu0 0.0
    %1148 = vmatpush.msra.mxu0 0.0
    %1149 = vmatpush.msra.mxu0 0.0
    %1150 = vmatpush.msra.mxu0 0.0
    %1151 = vmatpush.msra.mxu0 0.0
    %1152 = vmatpush.msra.mxu0 0.0
    %1153 = vmatpush.msra.mxu0 0.0
    %1154 = vmatpush.msra.mxu0 0.0
    %1155 = vmatpush.msra.mxu0 0.0
    %1156 = vmatpush.msra.mxu0 0.0
    %1157 = vmatpush.msra.mxu0 0.0
    %1158 = vmatpush.msra.mxu0 0.0
    %v1159 = vand.u32 %v1042, 4294901760
    %1160 = vmatpush.msra.mxu0 %v1159
    %v1161 = vand.u32 %v1038, 4294901760
    %1162 = vmatpush.msra.mxu0 %v1161
    %v1163 = vand.u32 %v477, 4294901760
    %v1164 = vsub.f32 %v477, %v1163
    %v1165 = vand.u32 %v1164, 4294901760
    %1166 = vmatmul.f32.gmra.mxu0 %v1165
    %v1167 = vpop.f32.mrf.mxu0
    %v1168 = vadd.f32 %v1138, %v1167
    %v1169 = vand.u32 %v480, 4294901760
    %v1170 = vsub.f32 %v480, %v1169
    %v1171 = vand.u32 %v1170, 4294901760
    %1172 = vmatmul.f32.gmra.mxu0 %v1171
    %v1173 = vpop.f32.mrf.mxu0
    %v1174 = vadd.f32 %v1143, %v1173
    %1175 = vdwg.mxu0
    %1176 = vmatpush.msra.mxu0 0.0
    %1177 = vmatpush.msra.mxu0 0.0
    %1178 = vmatpush.msra.mxu0 0.0
    %1179 = vmatpush.msra.mxu0 0.0
    %1180 = vmatpush.msra.mxu0 0.0
    %1181 = vmatpush.msra.mxu0 0.0
    %1182 = vmatpush.msra.mxu0 0.0
    %1183 = vmatpush.msra.mxu0 0.0
    %1184 = vmatpush.msra.mxu0 0.0
    %1185 = vmatpush.msra.mxu0 0.0
    %1186 = vmatpush.msra.mxu0 0.0
    %1187 = vmatpush.msra.mxu0 0.0
    %1188 = vmatpush.msra.mxu0 0.0
    %1189 = vmatpush.msra.mxu0 0.0
    %v1190 = vand.u32 %v1042, 4294901760
    %v1191 = vsub.f32 %v1042, %v1190
    %v1192 = vand.u32 %v1191, 4294901760
    %1193 = vmatpush.msra.mxu0 %v1192
    %v1194 = vand.u32 %v1038, 4294901760
    %v1195 = vsub.f32 %v1038, %v1194
    %v1196 = vand.u32 %v1195, 4294901760
    %1197 = vmatpush.msra.mxu0 %v1196
    %v1198 = vand.u32 %v477, 4294901760
    %1199 = vmatmul.f32.gmra.mxu0 %v1198
    %v1200 = vpop.f32.mrf.mxu0
    %v1201 = vadd.f32 %v1168, %v1200
    %v1202 = vand.u32 %v480, 4294901760
    %1203 = vmatmul.f32.gmra.mxu0 %v1202
    %v1204 = vpop.f32.mrf.mxu0
    %v1205 = vadd.f32 %v1174, %v1204
    %1206 = vdwg.mxu0
    %1207 = vmatpush.msra.mxu0 0.0
    %1208 = vmatpush.msra.mxu0 0.0
    %1209 = vmatpush.msra.mxu0 0.0
    %1210 = vmatpush.msra.mxu0 0.0
    %1211 = vmatpush.msra.mxu0 0.0
    %1212 = vmatpush.msra.mxu0 0.0
    %1213 = vmatpush.msra.mxu0 0.0
    %1214 = vmatpush.msra.mxu0 0.0
    %1215 = vmatpush.msra.mxu0 0.0
    %1216 = vmatpush.msra.mxu0 0.0
    %1217 = vmatpush.msra.mxu0 0.0
    %1218 = vmatpush.msra.mxu0 0.0
    %1219 = vmatpush.msra.mxu0 0.0
    %1220 = vmatpush.msra.mxu0 0.0
    %v1221 = vand.u32 %v1042, 4294901760
    %1222 = vmatpush.msra.mxu0 %v1221
    %v1223 = vand.u32 %v1038, 4294901760
    %1224 = vmatpush.msra.mxu0 %v1223
    %v1225 = vand.u32 %v477, 4294901760
    %1226 = vmatmul.f32.gmra.mxu0 %v1225
    %v1227 = vpop.f32.mrf.mxu0
    %v1228 = vadd.f32 %v1201, %v1227
    %v1229 = vand.u32 %v480, 4294901760
    %1230 = vmatmul.f32.gmra.mxu0 %v1229
    %v1231 = vpop.f32.mrf.mxu0
    %v1232 = vadd.f32 %v1205, %v1231
    %1233 = vdwg.mxu0
    %v1234 = vmul.f32 %v99, %v99
    %v1235 = vmul.f32 %v100, %v100
    %v1236 = vand.u32 %v98, 4294901760
    %1237 = vmatpush.msra.mxu0 %v1236
    %v1238 = vand.u32 %v97, 4294901760
    %1239 = vmatpush.msra.mxu0 %v1238
    %v1240 = vand.u32 %v96, 4294901760
    %1241 = vmatpush.msra.mxu0 %v1240
    %v1242 = vand.u32 %v95, 4294901760
    %1243 = vmatpush.msra.mxu0 %v1242
    %v1244 = vand.u32 %v94, 4294901760
    %1245 = vmatpush.msra.mxu0 %v1244
    %v1246 = vand.u32 %v93, 4294901760
    %1247 = vmatpush.msra.mxu0 %v1246
    %v1248 = vand.u32 %v92, 4294901760
    %1249 = vmatpush.msra.mxu0 %v1248
    %v1250 = vand.u32 %v91, 4294901760
    %1251 = vmatpush.msra.mxu0 %v1250
    %v1252 = vand.u32 %v90, 4294901760
    %1253 = vmatpush.msra.mxu0 %v1252
    %v1254 = vand.u32 %v89, 4294901760
    %1255 = vmatpush.msra.mxu0 %v1254
    %v1256 = vand.u32 %v88, 4294901760
    %1257 = vmatpush.msra.mxu0 %v1256
    %v1258 = vand.u32 %v87, 4294901760
    %1259 = vmatpush.msra.mxu0 %v1258
    %v1260 = vand.u32 %v86, 4294901760
    %1261 = vmatpush.msra.mxu0 %v1260
    %v1262 = vand.u32 %v85, 4294901760
    %1263 = vmatpush.msra.mxu0 %v1262
    %v1264 = vand.u32 %v84, 4294901760
    %1265 = vmatpush.msra.mxu0 %v1264
    %v1266 = vand.u32 %v83, 4294901760
    %1267 = vmatpush.msra.mxu0 %v1266
    %v1268 = vand.u32 %v1234, 4294901760
    %v1269 = vsub.f32 %v1234, %v1268
    %v1270 = vand.u32 %v1269, 4294901760
    %v1271 = vsub.f32 %v1269, %v1270
    %v1272 = vand.u32 %v1271, 4294901760
    %1273 = vmatmul.f32.gmra.mxu0 %v1272
    %v1274 = vpop.f32.mrf.mxu0
    %v1275 = vadd.f32 0.0, %v1274
    %v1276 = vand.u32 %v1235, 4294901760
    %v1277 = vsub.f32 %v1235, %v1276
    %v1278 = vand.u32 %v1277, 4294901760
    %v1279 = vsub.f32 %v1277, %v1278
    %v1280 = vand.u32 %v1279, 4294901760
    %1281 = vmatmul.f32.gmra.mxu0 %v1280
    %v1282 = vpop.f32.mrf.mxu0
    %v1283 = vadd.f32 0.0, %v1282
    %1284 = vdwg.mxu0
    %v1285 = vand.u32 %v98, 4294901760
    %v1286 = vsub.f32 %v98, %v1285
    %v1287 = vand.u32 %v1286, 4294901760
    %v1288 = vsub.f32 %v1286, %v1287
    %v1289 = vand.u32 %v1288, 4294901760
    %1290 = vmatpush.msra.mxu0 %v1289
    %v1291 = vand.u32 %v97, 4294901760
    %v1292 = vsub.f32 %v97, %v1291
    %v1293 = vand.u32 %v1292, 4294901760
    %v1294 = vsub.f32 %v1292, %v1293
    %v1295 = vand.u32 %v1294, 4294901760
    %1296 = vmatpush.msra.mxu0 %v1295
    %v1297 = vand.u32 %v96, 4294901760
    %v1298 = vsub.f32 %v96, %v1297
    %v1299 = vand.u32 %v1298, 4294901760
    %v1300 = vsub.f32 %v1298, %v1299
    %v1301 = vand.u32 %v1300, 4294901760
    %1302 = vmatpush.msra.mxu0 %v1301
    %v1303 = vand.u32 %v95, 4294901760
    %v1304 = vsub.f32 %v95, %v1303
    %v1305 = vand.u32 %v1304, 4294901760
    %v1306 = vsub.f32 %v1304, %v1305
    %v1307 = vand.u32 %v1306, 4294901760
    %1308 = vmatpush.msra.mxu0 %v1307
    %v1309 = vand.u32 %v94, 4294901760
    %v1310 = vsub.f32 %v94, %v1309
    %v1311 = vand.u32 %v1310, 4294901760
    %v1312 = vsub.f32 %v1310, %v1311
    %v1313 = vand.u32 %v1312, 4294901760
    %1314 = vmatpush.msra.mxu0 %v1313
    %v1315 = vand.u32 %v93, 4294901760
    %v1316 = vsub.f32 %v93, %v1315
    %v1317 = vand.u32 %v1316, 4294901760
    %v1318 = vsub.f32 %v1316, %v1317
    %v1319 = vand.u32 %v1318, 4294901760
    %1320 = vmatpush.msra.mxu0 %v1319
    %v1321 = vand.u32 %v92, 4294901760
    %v1322 = vsub.f32 %v92, %v1321
    %v1323 = vand.u32 %v1322, 4294901760
    %v1324 = vsub.f32 %v1322, %v1323
    %v1325 = vand.u32 %v1324, 4294901760
    %1326 = vmatpush.msra.mxu0 %v1325
    %v1327 = vand.u32 %v91, 4294901760
    %v1328 = vsub.f32 %v91, %v1327
    %v1329 = vand.u32 %v1328, 4294901760
    %v1330 = vsub.f32 %v1328, %v1329
    %v1331 = vand.u32 %v1330, 4294901760
    %1332 = vmatpush.msra.mxu0 %v1331
    %v1333 = vand.u32 %v90, 4294901760
    %v1334 = vsub.f32 %v90, %v1333
    %v1335 = vand.u32 %v1334, 4294901760
    %v1336 = vsub.f32 %v1334, %v1335
    %v1337 = vand.u32 %v1336, 4294901760
    %1338 = vmatpush.msra.mxu0 %v1337
    %v1339 = vand.u32 %v89, 4294901760
    %v1340 = vsub.f32 %v89, %v1339
    %v1341 = vand.u32 %v1340, 4294901760
    %v1342 = vsub.f32 %v1340, %v1341
    %v1343 = vand.u32 %v1342, 4294901760
    %1344 = vmatpush.msra.mxu0 %v1343
    %v1345 = vand.u32 %v88, 4294901760
    %v1346 = vsub.f32 %v88, %v1345
    %v1347 = vand.u32 %v1346, 4294901760
    %v1348 = vsub.f32 %v1346, %v1347
    %v1349 = vand.u32 %v1348, 4294901760
    %1350 = vmatpush.msra.mxu0 %v1349
    %v1351 = vand.u32 %v87, 4294901760
    %v1352 = vsub.f32 %v87, %v1351
    %v1353 = vand.u32 %v1352, 4294901760
    %v1354 = vsub.f32 %v1352, %v1353
    %v1355 = vand.u32 %v1354, 4294901760
    %1356 = vmatpush.msra.mxu0 %v1355
    %v1357 = vand.u32 %v86, 4294901760
    %v1358 = vsub.f32 %v86, %v1357
    %v1359 = vand.u32 %v1358, 4294901760
    %v1360 = vsub.f32 %v1358, %v1359
    %v1361 = vand.u32 %v1360, 4294901760
    %1362 = vmatpush.msra.mxu0 %v1361
    %v1363 = vand.u32 %v85, 4294901760
    %v1364 = vsub.f32 %v85, %v1363
    %v1365 = vand.u32 %v1364, 4294901760
    %v1366 = vsub.f32 %v1364, %v1365
    %v1367 = vand.u32 %v1366, 4294901760
    %1368 = vmatpush.msra.mxu0 %v1367
    %v1369 = vand.u32 %v84, 4294901760
    %v1370 = vsub.f32 %v84, %v1369
    %v1371 = vand.u32 %v1370, 4294901760
    %v1372 = vsub.f32 %v1370, %v1371
    %v1373 = vand.u32 %v1372, 4294901760
    %1374 = vmatpush.msra.mxu0 %v1373
    %v1375 = vand.u32 %v83, 4294901760
    %v1376 = vsub.f32 %v83, %v1375
    %v1377 = vand.u32 %v1376, 4294901760
    %v1378 = vsub.f32 %v1376, %v1377
    %v1379 = vand.u32 %v1378, 4294901760
    %1380 = vmatpush.msra.mxu0 %v1379
    %v1381 = vand.u32 %v1234, 4294901760
    %1382 = vmatmul.f32.gmra.mxu0 %v1381
    %v1383 = vpop.f32.mrf.mxu0
    %v1384 = vadd.f32 %v1275, %v1383
    %v1385 = vand.u32 %v1235, 4294901760
    %1386 = vmatmul.f32.gmra.mxu0 %v1385
    %v1387 = vpop.f32.mrf.mxu0
    %v1388 = vadd.f32 %v1283, %v1387
    %1389 = vdwg.mxu0
    %v1390 = vand.u32 %v98, 4294901760
    %v1391 = vsub.f32 %v98, %v1390
    %1392 = vmatpush.msra.mxu0 %v1391
    %v1393 = vand.u32 %v97, 4294901760
    %v1394 = vsub.f32 %v97, %v1393
    %1395 = vmatpush.msra.mxu0 %v1394
    %v1396 = vand.u32 %v96, 4294901760
    %v1397 = vsub.f32 %v96, %v1396
    %1398 = vmatpush.msra.mxu0 %v1397
    %v1399 = vand.u32 %v95, 4294901760
    %v1400 = vsub.f32 %v95, %v1399
    %1401 = vmatpush.msra.mxu0 %v1400
    %v1402 = vand.u32 %v94, 4294901760
    %v1403 = vsub.f32 %v94, %v1402
    %1404 = vmatpush.msra.mxu0 %v1403
    %v1405 = vand.u32 %v93, 4294901760
    %v1406 = vsub.f32 %v93, %v1405
    %1407 = vmatpush.msra.mxu0 %v1406
    %v1408 = vand.u32 %v92, 4294901760
    %v1409 = vsub.f32 %v92, %v1408
    %1410 = vmatpush.msra.mxu0 %v1409
    %v1411 = vand.u32 %v91, 4294901760
    %v1412 = vsub.f32 %v91, %v1411
    %1413 = vmatpush.msra.mxu0 %v1412
    %v1414 = vand.u32 %v90, 4294901760
    %v1415 = vsub.f32 %v90, %v1414
    %1416 = vmatpush.msra.mxu0 %v1415
    %v1417 = vand.u32 %v89, 4294901760
    %v1418 = vsub.f32 %v89, %v1417
    %1419 = vmatpush.msra.mxu0 %v1418
    %v1420 = vand.u32 %v88, 4294901760
    %v1421 = vsub.f32 %v88, %v1420
    %1422 = vmatpush.msra.mxu0 %v1421
    %v1423 = vand.u32 %v87, 4294901760
    %v1424 = vsub.f32 %v87, %v1423
    %1425 = vmatpush.msra.mxu0 %v1424
    %v1426 = vand.u32 %v86, 4294901760
    %v1427 = vsub.f32 %v86, %v1426
    %1428 = vmatpush.msra.mxu0 %v1427
    %v1429 = vand.u32 %v85, 4294901760
    %v1430 = vsub.f32 %v85, %v1429
    %1431 = vmatpush.msra.mxu0 %v1430
    %v1432 = vand.u32 %v84, 4294901760
    %v1433 = vsub.f32 %v84, %v1432
    %1434 = vmatpush.msra.mxu0 %v1433
    %v1435 = vand.u32 %v83, 4294901760
    %v1436 = vsub.f32 %v83, %v1435
    %1437 = vmatpush.msra.mxu0 %v1436
    %v1438 = vand.u32 %v1234, 4294901760
    %v1439 = vsub.f32 %v1234, %v1438
    %1440 = vmatmul.f32.gmra.mxu0 %v1439
    %v1441 = vpop.f32.mrf.mxu0
    %v1442 = vadd.f32 %v1384, %v1441
    %v1443 = vand.u32 %v1235, 4294901760
    %v1444 = vsub.f32 %v1235, %v1443
    %1445 = vmatmul.f32.gmra.mxu0 %v1444
    %v1446 = vpop.f32.mrf.mxu0
    %v1447 = vadd.f32 %v1388, %v1446
    %1448 = vdwg.mxu0
    %v1449 = vand.u32 %v98, 4294901760
    %1450 = vmatpush.msra.mxu0 %v1449
    %v1451 = vand.u32 %v97, 4294901760
    %1452 = vmatpush.msra.mxu0 %v1451
    %v1453 = vand.u32 %v96, 4294901760
    %1454 = vmatpush.msra.mxu0 %v1453
    %v1455 = vand.u32 %v95, 4294901760
    %1456 = vmatpush.msra.mxu0 %v1455
    %v1457 = vand.u32 %v94, 4294901760
    %1458 = vmatpush.msra.mxu0 %v1457
    %v1459 = vand.u32 %v93, 4294901760
    %1460 = vmatpush.msra.mxu0 %v1459
    %v1461 = vand.u32 %v92, 4294901760
    %1462 = vmatpush.msra.mxu0 %v1461
    %v1463 = vand.u32 %v91, 4294901760
    %1464 = vmatpush.msra.mxu0 %v1463
    %v1465 = vand.u32 %v90, 4294901760
    %1466 = vmatpush.msra.mxu0 %v1465
    %v1467 = vand.u32 %v89, 4294901760
    %1468 = vmatpush.msra.mxu0 %v1467
    %v1469 = vand.u32 %v88, 4294901760
    %1470 = vmatpush.msra.mxu0 %v1469
    %v1471 = vand.u32 %v87, 4294901760
    %1472 = vmatpush.msra.mxu0 %v1471
    %v1473 = vand.u32 %v86, 4294901760
    %1474 = vmatpush.msra.mxu0 %v1473
    %v1475 = vand.u32 %v85, 4294901760
    %1476 = vmatpush.msra.mxu0 %v1475
    %v1477 = vand.u32 %v84, 4294901760
    %1478 = vmatpush.msra.mxu0 %v1477
    %v1479 = vand.u32 %v83, 4294901760
    %1480 = vmatpush.msra.mxu0 %v1479
    %v1481 = vand.u32 %v1234, 4294901760
    %v1482 = vsub.f32 %v1234, %v1481
    %v1483 = vand.u32 %v1482, 4294901760
    %1484 = vmatmul.f32.gmra.mxu0 %v1483
    %v1485 = vpop.f32.mrf.mxu0
    %v1486 = vadd.f32 %v1442, %v1485
    %v1487 = vand.u32 %v1235, 4294901760
    %v1488 = vsub.f32 %v1235, %v1487
    %v1489 = vand.u32 %v1488, 4294901760
    %1490 = vmatmul.f32.gmra.mxu0 %v1489
    %v1491 = vpop.f32.mrf.mxu0
    %v1492 = vadd.f32 %v1447, %v1491
    %1493 = vdwg.mxu0
    %v1494 = vand.u32 %v98, 4294901760
    %v1495 = vsub.f32 %v98, %v1494
    %v1496 = vand.u32 %v1495, 4294901760
    %1497 = vmatpush.msra.mxu0 %v1496
    %v1498 = vand.u32 %v97, 4294901760
    %v1499 = vsub.f32 %v97, %v1498
    %v1500 = vand.u32 %v1499, 4294901760
    %1501 = vmatpush.msra.mxu0 %v1500
    %v1502 = vand.u32 %v96, 4294901760
    %v1503 = vsub.f32 %v96, %v1502
    %v1504 = vand.u32 %v1503, 4294901760
    %1505 = vmatpush.msra.mxu0 %v1504
    %v1506 = vand.u32 %v95, 4294901760
    %v1507 = vsub.f32 %v95, %v1506
    %v1508 = vand.u32 %v1507, 4294901760
    %1509 = vmatpush.msra.mxu0 %v1508
    %v1510 = vand.u32 %v94, 4294901760
    %v1511 = vsub.f32 %v94, %v1510
    %v1512 = vand.u32 %v1511, 4294901760
    %1513 = vmatpush.msra.mxu0 %v1512
    %v1514 = vand.u32 %v93, 4294901760
    %v1515 = vsub.f32 %v93, %v1514
    %v1516 = vand.u32 %v1515, 4294901760
    %1517 = vmatpush.msra.mxu0 %v1516
    %v1518 = vand.u32 %v92, 4294901760
    %v1519 = vsub.f32 %v92, %v1518
    %v1520 = vand.u32 %v1519, 4294901760
    %1521 = vmatpush.msra.mxu0 %v1520
    %v1522 = vand.u32 %v91, 4294901760
    %v1523 = vsub.f32 %v91, %v1522
    %v1524 = vand.u32 %v1523, 4294901760
    %1525 = vmatpush.msra.mxu0 %v1524
    %v1526 = vand.u32 %v90, 4294901760
    %v1527 = vsub.f32 %v90, %v1526
    %v1528 = vand.u32 %v1527, 4294901760
    %1529 = vmatpush.msra.mxu0 %v1528
    %v1530 = vand.u32 %v89, 4294901760
    %v1531 = vsub.f32 %v89, %v1530
    %v1532 = vand.u32 %v1531, 4294901760
    %1533 = vmatpush.msra.mxu0 %v1532
    %v1534 = vand.u32 %v88, 4294901760
    %v1535 = vsub.f32 %v88, %v1534
    %v1536 = vand.u32 %v1535, 4294901760
    %1537 = vmatpush.msra.mxu0 %v1536
    %v1538 = vand.u32 %v87, 4294901760
    %v1539 = vsub.f32 %v87, %v1538
    %v1540 = vand.u32 %v1539, 4294901760
    %1541 = vmatpush.msra.mxu0 %v1540
    %v1542 = vand.u32 %v86, 4294901760
    %v1543 = vsub.f32 %v86, %v1542
    %v1544 = vand.u32 %v1543, 4294901760
    %1545 = vmatpush.msra.mxu0 %v1544
    %v1546 = vand.u32 %v85, 4294901760
    %v1547 = vsub.f32 %v85, %v1546
    %v1548 = vand.u32 %v1547, 4294901760
    %1549 = vmatpush.msra.mxu0 %v1548
    %v1550 = vand.u32 %v84, 4294901760
    %v1551 = vsub.f32 %v84, %v1550
    %v1552 = vand.u32 %v1551, 4294901760
    %1553 = vmatpush.msra.mxu0 %v1552
    %v1554 = vand.u32 %v83, 4294901760
    %v1555 = vsub.f32 %v83, %v1554
    %v1556 = vand.u32 %v1555, 4294901760
    %1557 = vmatpush.msra.mxu0 %v1556
    %v1558 = vand.u32 %v1234, 4294901760
    %1559 = vmatmul.f32.gmra.mxu0 %v1558
    %v1560 = vpop.f32.mrf.mxu0
    %v1561 = vadd.f32 %v1486, %v1560
    %v1562 = vand.u32 %v1235, 4294901760
    %1563 = vmatmul.f32.gmra.mxu0 %v1562
    %v1564 = vpop.f32.mrf.mxu0
    %v1565 = vadd.f32 %v1492, %v1564
    %1566 = vdwg.mxu0
    %v1567 = vand.u32 %v98, 4294901760
    %1568 = vmatpush.msra.mxu0 %v1567
    %v1569 = vand.u32 %v97, 4294901760
    %1570 = vmatpush.msra.mxu0 %v1569
    %v1571 = vand.u32 %v96, 4294901760
    %1572 = vmatpush.msra.mxu0 %v1571
    %v1573 = vand.u32 %v95, 4294901760
    %1574 = vmatpush.msra.mxu0 %v1573
    %v1575 = vand.u32 %v94, 4294901760
    %1576 = vmatpush.msra.mxu0 %v1575
    %v1577 = vand.u32 %v93, 4294901760
    %1578 = vmatpush.msra.mxu0 %v1577
    %v1579 = vand.u32 %v92, 4294901760
    %1580 = vmatpush.msra.mxu0 %v1579
    %v1581 = vand.u32 %v91, 4294901760
    %1582 = vmatpush.msra.mxu0 %v1581
    %v1583 = vand.u32 %v90, 4294901760
    %1584 = vmatpush.msra.mxu0 %v1583
    %v1585 = vand.u32 %v89, 4294901760
    %1586 = vmatpush.msra.mxu0 %v1585
    %v1587 = vand.u32 %v88, 4294901760
    %1588 = vmatpush.msra.mxu0 %v1587
    %v1589 = vand.u32 %v87, 4294901760
    %1590 = vmatpush.msra.mxu0 %v1589
    %v1591 = vand.u32 %v86, 4294901760
    %1592 = vmatpush.msra.mxu0 %v1591
    %v1593 = vand.u32 %v85, 4294901760
    %1594 = vmatpush.msra.mxu0 %v1593
    %v1595 = vand.u32 %v84, 4294901760
    %1596 = vmatpush.msra.mxu0 %v1595
    %v1597 = vand.u32 %v83, 4294901760
    %1598 = vmatpush.msra.mxu0 %v1597
    %v1599 = vand.u32 %v1234, 4294901760
    %1600 = vmatmul.f32.gmra.mxu0 %v1599
    %v1601 = vpop.f32.mrf.mxu0
    %v1602 = vadd.f32 %v1561, %v1601
    %v1603 = vand.u32 %v1235, 4294901760
    %1604 = vmatmul.f32.gmra.mxu0 %v1603
    %v1605 = vpop.f32.mrf.mxu0
    %v1606 = vadd.f32 %v1565, %v1605
    %1607 = vdwg.mxu0
    %1608 = vmatpush.msra.mxu0 0.0
    %1609 = vmatpush.msra.mxu0 0.0
    %1610 = vmatpush.msra.mxu0 0.0
    %1611 = vmatpush.msra.mxu0 0.0
    %1612 = vmatpush.msra.mxu0 0.0
    %1613 = vmatpush.msra.mxu0 0.0
    %1614 = vmatpush.msra.mxu0 0.0
    %1615 = vmatpush.msra.mxu0 0.0
    %1616 = vmatpush.msra.mxu0 0.0
    %1617 = vmatpush.msra.mxu0 0.0
    %1618 = vmatpush.msra.mxu0 0.0
    %1619 = vmatpush.msra.mxu0 0.0
    %1620 = vmatpush.msra.mxu0 0.0
    %1621 = vmatpush.msra.mxu0 0.0
    %v1622 = vand.u32 %v1606, 4294901760
    %1623 = vmatpush.msra.mxu0 %v1622
    %v1624 = vand.u32 %v1602, 4294901760
    %1625 = vmatpush.msra.mxu0 %v1624
    %v1626 = vand.u32 %v477, 4294901760
    %v1627 = vsub.f32 %v477, %v1626
    %v1628 = vand.u32 %v1627, 4294901760
    %v1629 = vsub.f32 %v1627, %v1628
    %v1630 = vand.u32 %v1629, 4294901760
    %1631 = vmatmul.f32.gmra.mxu0 %v1630
    %v1632 = vpop.f32.mrf.mxu0
    %v1633 = vadd.f32 0.0, %v1632
    %v1634 = vand.u32 %v480, 4294901760
    %v1635 = vsub.f32 %v480, %v1634
    %v1636 = vand.u32 %v1635, 4294901760
    %v1637 = vsub.f32 %v1635, %v1636
    %v1638 = vand.u32 %v1637, 4294901760
    %1639 = vmatmul.f32.gmra.mxu0 %v1638
    %v1640 = vpop.f32.mrf.mxu0
    %v1641 = vadd.f32 0.0, %v1640
    %1642 = vdwg.mxu0
    %1643 = vmatpush.msra.mxu0 0.0
    %1644 = vmatpush.msra.mxu0 0.0
    %1645 = vmatpush.msra.mxu0 0.0
    %1646 = vmatpush.msra.mxu0 0.0
    %1647 = vmatpush.msra.mxu0 0.0
    %1648 = vmatpush.msra.mxu0 0.0
    %1649 = vmatpush.msra.mxu0 0.0
    %1650 = vmatpush.msra.mxu0 0.0
    %1651 = vmatpush.msra.mxu0 0.0
    %1652 = vmatpush.msra.mxu0 0.0
    %1653 = vmatpush.msra.mxu0 0.0
    %1654 = vmatpush.msra.mxu0 0.0
    %1655 = vmatpush.msra.mxu0 0.0
    %1656 = vmatpush.msra.mxu0 0.0
    %v1657 = vand.u32 %v1606, 4294901760
    %v1658 = vsub.f32 %v1606, %v1657
    %v1659 = vand.u32 %v1658, 4294901760
    %v1660 = vsub.f32 %v1658, %v1659
    %v1661 = vand.u32 %v1660, 4294901760
    %1662 = vmatpush.msra.mxu0 %v1661
    %v1663 = vand.u32 %v1602, 4294901760
    %v1664 = vsub.f32 %v1602, %v1663
    %v1665 = vand.u32 %v1664, 4294901760
    %v1666 = vsub.f32 %v1664, %v1665
    %v1667 = vand.u32 %v1666, 4294901760
    %1668 = vmatpush.msra.mxu0 %v1667
    %v1669 = vand.u32 %v477, 4294901760
    %1670 = vmatmul.f32.gmra.mxu0 %v1669
    %v1671 = vpop.f32.mrf.mxu0
    %v1672 = vadd.f32 %v1633, %v1671
    %v1673 = vand.u32 %v480, 4294901760
    %1674 = vmatmul.f32.gmra.mxu0 %v1673
    %v1675 = vpop.f32.mrf.mxu0
    %v1676 = vadd.f32 %v1641, %v1675
    %1677 = vdwg.mxu0
    %1678 = vmatpush.msra.mxu0 0.0
    %1679 = vmatpush.msra.mxu0 0.0
    %1680 = vmatpush.msra.mxu0 0.0
    %1681 = vmatpush.msra.mxu0 0.0
    %1682 = vmatpush.msra.mxu0 0.0
    %1683 = vmatpush.msra.mxu0 0.0
    %1684 = vmatpush.msra.mxu0 0.0
    %1685 = vmatpush.msra.mxu0 0.0
    %1686 = vmatpush.msra.mxu0 0.0
    %1687 = vmatpush.msra.mxu0 0.0
    %1688 = vmatpush.msra.mxu0 0.0
    %1689 = vmatpush.msra.mxu0 0.0
    %1690 = vmatpush.msra.mxu0 0.0
    %1691 = vmatpush.msra.mxu0 0.0
    %v1692 = vand.u32 %v1606, 4294901760
    %v1693 = vsub.f32 %v1606, %v1692
    %1694 = vmatpush.msra.mxu0 %v1693
    %v1695 = vand.u32 %v1602, 4294901760
    %v1696 = vsub.f32 %v1602, %v1695
    %1697 = vmatpush.msra.mxu0 %v1696
    %v1698 = vand.u32 %v477, 4294901760
    %v1699 = vsub.f32 %v477, %v1698
    %1700 = vmatmul.f32.gmra.mxu0 %v1699
    %v1701 = vpop.f32.mrf.mxu0
    %v1702 = vadd.f32 %v1672, %v1701
    %v1703 = vand.u32 %v480, 4294901760
    %v1704 = vsub.f32 %v480, %v1703
    %1705 = vmatmul.f32.gmra.mxu0 %v1704
    %v1706 = vpop.f32.mrf.mxu0
    %v1707 = vadd.f32 %v1676, %v1706
    %1708 = vdwg.mxu0
    %1709 = vmatpush.msra.mxu0 0.0
    %1710 = vmatpush.msra.mxu0 0.0
    %1711 = vmatpush.msra.mxu0 0.0
    %1712 = vmatpush.msra.mxu0 0.0
    %1713 = vmatpush.msra.mxu0 0.0
    %1714 = vmatpush.msra.mxu0 0.0
    %1715 = vmatpush.msra.mxu0 0.0
    %1716 = vmatpush.msra.mxu0 0.0
    %1717 = vmatpush.msra.mxu0 0.0
    %1718 = vmatpush.msra.mxu0 0.0
    %1719 = vmatpush.msra.mxu0 0.0
    %1720 = vmatpush.msra.mxu0 0.0
    %1721 = vmatpush.msra.mxu0 0.0
    %1722 = vmatpush.msra.mxu0 0.0
    %v1723 = vand.u32 %v1606, 4294901760
    %1724 = vmatpush.msra.mxu0 %v1723
    %v1725 = vand.u32 %v1602, 4294901760
    %1726 = vmatpush.msra.mxu0 %v1725
    %v1727 = vand.u32 %v477, 4294901760
    %v1728 = vsub.f32 %v477, %v1727
    %v1729 = vand.u32 %v1728, 4294901760
    %1730 = vmatmul.f32.gmra.mxu0 %v1729
    %v1731 = vpop.f32.mrf.mxu0
    %v1732 = vadd.f32 %v1702, %v1731
    %v1733 = vand.u32 %v480, 4294901760
    %v1734 = vsub.f32 %v480, %v1733
    %v1735 = vand.u32 %v1734, 4294901760
    %1736 = vmatmul.f32.gmra.mxu0 %v1735
    %v1737 = vpop.f32.mrf.mxu0
    %v1738 = vadd.f32 %v1707, %v1737
    %1739 = vdwg.mxu0
    %1740 = vmatpush.msra.mxu0 0.0
    %1741 = vmatpush.msra.mxu0 0.0
    %1742 = vmatpush.msra.mxu0 0.0
    %1743 = vmatpush.msra.mxu0 0.0
    %1744 = vmatpush.msra.mxu0 0.0
    %1745 = vmatpush.msra.mxu0 0.0
    %1746 = vmatpush.msra.mxu0 0.0
    %1747 = vmatpush.msra.mxu0 0.0
    %1748 = vmatpush.msra.mxu0 0.0
    %1749 = vmatpush.msra.mxu0 0.0
    %1750 = vmatpush.msra.mxu0 0.0
    %1751 = vmatpush.msra.mxu0 0.0
    %1752 = vmatpush.msra.mxu0 0.0
    %1753 = vmatpush.msra.mxu0 0.0
    %v1754 = vand.u32 %v1606, 4294901760
    %v1755 = vsub.f32 %v1606, %v1754
    %v1756 = vand.u32 %v1755, 4294901760
    %1757 = vmatpush.msra.mxu0 %v1756
    %v1758 = vand.u32 %v1602, 4294901760
    %v1759 = vsub.f32 %v1602, %v1758
    %v1760 = vand.u32 %v1759, 4294901760
    %1761 = vmatpush.msra.mxu0 %v1760
    %v1762 = vand.u32 %v477, 4294901760
    %1763 = vmatmul.f32.gmra.mxu0 %v1762
    %v1764 = vpop.f32.mrf.mxu0
    %v1765 = vadd.f32 %v1732, %v1764
    %v1766 = vand.u32 %v480, 4294901760
    %1767 = vmatmul.f32.gmra.mxu0 %v1766
    %v1768 = vpop.f32.mrf.mxu0
    %v1769 = vadd.f32 %v1738, %v1768
    %1770 = vdwg.mxu0
    %1771 = vmatpush.msra.mxu0 0.0
    %1772 = vmatpush.msra.mxu0 0.0
    %1773 = vmatpush.msra.mxu0 0.0
    %1774 = vmatpush.msra.mxu0 0.0
    %1775 = vmatpush.msra.mxu0 0.0
    %1776 = vmatpush.msra.mxu0 0.0
    %1777 = vmatpush.msra.mxu0 0.0
    %1778 = vmatpush.msra.mxu0 0.0
    %1779 = vmatpush.msra.mxu0 0.0
    %1780 = vmatpush.msra.mxu0 0.0
    %1781 = vmatpush.msra.mxu0 0.0
    %1782 = vmatpush.msra.mxu0 0.0
    %1783 = vmatpush.msra.mxu0 0.0
    %1784 = vmatpush.msra.mxu0 0.0
    %v1785 = vand.u32 %v1606, 4294901760
    %1786 = vmatpush.msra.mxu0 %v1785
    %v1787 = vand.u32 %v1602, 4294901760
    %1788 = vmatpush.msra.mxu0 %v1787
    %v1789 = vand.u32 %v477, 4294901760
    %1790 = vmatmul.f32.gmra.mxu0 %v1789
    %v1791 = vpop.f32.mrf.mxu0
    %v1792 = vadd.f32 %v1765, %v1791
    %v1793 = vand.u32 %v480, 4294901760
    %1794 = vmatmul.f32.gmra.mxu0 %v1793
    %v1795 = vpop.f32.mrf.mxu0
    %v1796 = vadd.f32 %v1769, %v1795
    %1797 = vdwg.mxu0
    %v1798 = vmul.f32 %v101, %v101
    %v1799 = vmul.f32 %v102, %v102
    %v1800 = vand.u32 %v98, 4294901760
    %1801 = vmatpush.msra.mxu0 %v1800
    %v1802 = vand.u32 %v97, 4294901760
    %1803 = vmatpush.msra.mxu0 %v1802
    %v1804 = vand.u32 %v96, 4294901760
    %1805 = vmatpush.msra.mxu0 %v1804
    %v1806 = vand.u32 %v95, 4294901760
    %1807 = vmatpush.msra.mxu0 %v1806
    %v1808 = vand.u32 %v94, 4294901760
    %1809 = vmatpush.msra.mxu0 %v1808
    %v1810 = vand.u32 %v93, 4294901760
    %1811 = vmatpush.msra.mxu0 %v1810
    %v1812 = vand.u32 %v92, 4294901760
    %1813 = vmatpush.msra.mxu0 %v1812
    %v1814 = vand.u32 %v91, 4294901760
    %1815 = vmatpush.msra.mxu0 %v1814
    %v1816 = vand.u32 %v90, 4294901760
    %1817 = vmatpush.msra.mxu0 %v1816
    %v1818 = vand.u32 %v89, 4294901760
    %1819 = vmatpush.msra.mxu0 %v1818
    %v1820 = vand.u32 %v88, 4294901760
    %1821 = vmatpush.msra.mxu0 %v1820
    %v1822 = vand.u32 %v87, 4294901760
    %1823 = vmatpush.msra.mxu0 %v1822
    %v1824 = vand.u32 %v86, 4294901760
    %1825 = vmatpush.msra.mxu0 %v1824
    %v1826 = vand.u32 %v85, 4294901760
    %1827 = vmatpush.msra.mxu0 %v1826
    %v1828 = vand.u32 %v84, 4294901760
    %1829 = vmatpush.msra.mxu0 %v1828
    %v1830 = vand.u32 %v83, 4294901760
    %1831 = vmatpush.msra.mxu0 %v1830
    %v1832 = vand.u32 %v1798, 4294901760
    %v1833 = vsub.f32 %v1798, %v1832
    %v1834 = vand.u32 %v1833, 4294901760
    %v1835 = vsub.f32 %v1833, %v1834
    %v1836 = vand.u32 %v1835, 4294901760
    %1837 = vmatmul.f32.gmra.mxu0 %v1836
    %v1838 = vpop.f32.mrf.mxu0
    %v1839 = vadd.f32 0.0, %v1838
    %v1840 = vand.u32 %v1799, 4294901760
    %v1841 = vsub.f32 %v1799, %v1840
    %v1842 = vand.u32 %v1841, 4294901760
    %v1843 = vsub.f32 %v1841, %v1842
    %v1844 = vand.u32 %v1843, 4294901760
    %1845 = vmatmul.f32.gmra.mxu0 %v1844
    %v1846 = vpop.f32.mrf.mxu0
    %v1847 = vadd.f32 0.0, %v1846
    %1848 = vdwg.mxu0
    %v1849 = vand.u32 %v98, 4294901760
    %v1850 = vsub.f32 %v98, %v1849
    %v1851 = vand.u32 %v1850, 4294901760
    %v1852 = vsub.f32 %v1850, %v1851
    %v1853 = vand.u32 %v1852, 4294901760
    %1854 = vmatpush.msra.mxu0 %v1853
    %v1855 = vand.u32 %v97, 4294901760
    %v1856 = vsub.f32 %v97, %v1855
    %v1857 = vand.u32 %v1856, 4294901760
    %v1858 = vsub.f32 %v1856, %v1857
    %v1859 = vand.u32 %v1858, 4294901760
    %1860 = vmatpush.msra.mxu0 %v1859
    %v1861 = vand.u32 %v96, 4294901760
    %v1862 = vsub.f32 %v96, %v1861
    %v1863 = vand.u32 %v1862, 4294901760
    %v1864 = vsub.f32 %v1862, %v1863
    %v1865 = vand.u32 %v1864, 4294901760
    %1866 = vmatpush.msra.mxu0 %v1865
    %v1867 = vand.u32 %v95, 4294901760
    %v1868 = vsub.f32 %v95, %v1867
    %v1869 = vand.u32 %v1868, 4294901760
    %v1870 = vsub.f32 %v1868, %v1869
    %v1871 = vand.u32 %v1870, 4294901760
    %1872 = vmatpush.msra.mxu0 %v1871
    %v1873 = vand.u32 %v94, 4294901760
    %v1874 = vsub.f32 %v94, %v1873
    %v1875 = vand.u32 %v1874, 4294901760
    %v1876 = vsub.f32 %v1874, %v1875
    %v1877 = vand.u32 %v1876, 4294901760
    %1878 = vmatpush.msra.mxu0 %v1877
    %v1879 = vand.u32 %v93, 4294901760
    %v1880 = vsub.f32 %v93, %v1879
    %v1881 = vand.u32 %v1880, 4294901760
    %v1882 = vsub.f32 %v1880, %v1881
    %v1883 = vand.u32 %v1882, 4294901760
    %1884 = vmatpush.msra.mxu0 %v1883
    %v1885 = vand.u32 %v92, 4294901760
    %v1886 = vsub.f32 %v92, %v1885
    %v1887 = vand.u32 %v1886, 4294901760
    %v1888 = vsub.f32 %v1886, %v1887
    %v1889 = vand.u32 %v1888, 4294901760
    %1890 = vmatpush.msra.mxu0 %v1889
    %v1891 = vand.u32 %v91, 4294901760
    %v1892 = vsub.f32 %v91, %v1891
    %v1893 = vand.u32 %v1892, 4294901760
    %v1894 = vsub.f32 %v1892, %v1893
    %v1895 = vand.u32 %v1894, 4294901760
    %1896 = vmatpush.msra.mxu0 %v1895
    %v1897 = vand.u32 %v90, 4294901760
    %v1898 = vsub.f32 %v90, %v1897
    %v1899 = vand.u32 %v1898, 4294901760
    %v1900 = vsub.f32 %v1898, %v1899
    %v1901 = vand.u32 %v1900, 4294901760
    %1902 = vmatpush.msra.mxu0 %v1901
    %v1903 = vand.u32 %v89, 4294901760
    %v1904 = vsub.f32 %v89, %v1903
    %v1905 = vand.u32 %v1904, 4294901760
    %v1906 = vsub.f32 %v1904, %v1905
    %v1907 = vand.u32 %v1906, 4294901760
    %1908 = vmatpush.msra.mxu0 %v1907
    %v1909 = vand.u32 %v88, 4294901760
    %v1910 = vsub.f32 %v88, %v1909
    %v1911 = vand.u32 %v1910, 4294901760
    %v1912 = vsub.f32 %v1910, %v1911
    %v1913 = vand.u32 %v1912, 4294901760
    %1914 = vmatpush.msra.mxu0 %v1913
    %v1915 = vand.u32 %v87, 4294901760
    %v1916 = vsub.f32 %v87, %v1915
    %v1917 = vand.u32 %v1916, 4294901760
    %v1918 = vsub.f32 %v1916, %v1917
    %v1919 = vand.u32 %v1918, 4294901760
    %1920 = vmatpush.msra.mxu0 %v1919
    %v1921 = vand.u32 %v86, 4294901760
    %v1922 = vsub.f32 %v86, %v1921
    %v1923 = vand.u32 %v1922, 4294901760
    %v1924 = vsub.f32 %v1922, %v1923
    %v1925 = vand.u32 %v1924, 4294901760
    %1926 = vmatpush.msra.mxu0 %v1925
    %v1927 = vand.u32 %v85, 4294901760
    %v1928 = vsub.f32 %v85, %v1927
    %v1929 = vand.u32 %v1928, 4294901760
    %v1930 = vsub.f32 %v1928, %v1929
    %v1931 = vand.u32 %v1930, 4294901760
    %1932 = vmatpush.msra.mxu0 %v1931
    %v1933 = vand.u32 %v84, 4294901760
    %v1934 = vsub.f32 %v84, %v1933
    %v1935 = vand.u32 %v1934, 4294901760
    %v1936 = vsub.f32 %v1934, %v1935
    %v1937 = vand.u32 %v1936, 4294901760
    %1938 = vmatpush.msra.mxu0 %v1937
    %v1939 = vand.u32 %v83, 4294901760
    %v1940 = vsub.f32 %v83, %v1939
    %v1941 = vand.u32 %v1940, 4294901760
    %v1942 = vsub.f32 %v1940, %v1941
    %v1943 = vand.u32 %v1942, 4294901760
    %1944 = vmatpush.msra.mxu0 %v1943
    %v1945 = vand.u32 %v1798, 4294901760
    %1946 = vmatmul.f32.gmra.mxu0 %v1945
    %v1947 = vpop.f32.mrf.mxu0
    %v1948 = vadd.f32 %v1839, %v1947
    %v1949 = vand.u32 %v1799, 4294901760
    %1950 = vmatmul.f32.gmra.mxu0 %v1949
    %v1951 = vpop.f32.mrf.mxu0
    %v1952 = vadd.f32 %v1847, %v1951
    %1953 = vdwg.mxu0
    %v1954 = vand.u32 %v98, 4294901760
    %v1955 = vsub.f32 %v98, %v1954
    %1956 = vmatpush.msra.mxu0 %v1955
    %v1957 = vand.u32 %v97, 4294901760
    %v1958 = vsub.f32 %v97, %v1957
    %1959 = vmatpush.msra.mxu0 %v1958
    %v1960 = vand.u32 %v96, 4294901760
    %v1961 = vsub.f32 %v96, %v1960
    %1962 = vmatpush.msra.mxu0 %v1961
    %v1963 = vand.u32 %v95, 4294901760
    %v1964 = vsub.f32 %v95, %v1963
    %1965 = vmatpush.msra.mxu0 %v1964
    %v1966 = vand.u32 %v94, 4294901760
    %v1967 = vsub.f32 %v94, %v1966
    %1968 = vmatpush.msra.mxu0 %v1967
    %v1969 = vand.u32 %v93, 4294901760
    %v1970 = vsub.f32 %v93, %v1969
    %1971 = vmatpush.msra.mxu0 %v1970
    %v1972 = vand.u32 %v92, 4294901760
    %v1973 = vsub.f32 %v92, %v1972
    %1974 = vmatpush.msra.mxu0 %v1973
    %v1975 = vand.u32 %v91, 4294901760
    %v1976 = vsub.f32 %v91, %v1975
    %1977 = vmatpush.msra.mxu0 %v1976
    %v1978 = vand.u32 %v90, 4294901760
    %v1979 = vsub.f32 %v90, %v1978
    %1980 = vmatpush.msra.mxu0 %v1979
    %v1981 = vand.u32 %v89, 4294901760
    %v1982 = vsub.f32 %v89, %v1981
    %1983 = vmatpush.msra.mxu0 %v1982
    %v1984 = vand.u32 %v88, 4294901760
    %v1985 = vsub.f32 %v88, %v1984
    %1986 = vmatpush.msra.mxu0 %v1985
    %v1987 = vand.u32 %v87, 4294901760
    %v1988 = vsub.f32 %v87, %v1987
    %1989 = vmatpush.msra.mxu0 %v1988
    %v1990 = vand.u32 %v86, 4294901760
    %v1991 = vsub.f32 %v86, %v1990
    %1992 = vmatpush.msra.mxu0 %v1991
    %v1993 = vand.u32 %v85, 4294901760
    %v1994 = vsub.f32 %v85, %v1993
    %1995 = vmatpush.msra.mxu0 %v1994
    %v1996 = vand.u32 %v84, 4294901760
    %v1997 = vsub.f32 %v84, %v1996
    %1998 = vmatpush.msra.mxu0 %v1997
    %v1999 = vand.u32 %v83, 4294901760
    %v2000 = vsub.f32 %v83, %v1999
    %2001 = vmatpush.msra.mxu0 %v2000
    %v2002 = vand.u32 %v1798, 4294901760
    %v2003 = vsub.f32 %v1798, %v2002
    %2004 = vmatmul.f32.gmra.mxu0 %v2003
    %v2005 = vpop.f32.mrf.mxu0
    %v2006 = vadd.f32 %v1948, %v2005
    %v2007 = vand.u32 %v1799, 4294901760
    %v2008 = vsub.f32 %v1799, %v2007
    %2009 = vmatmul.f32.gmra.mxu0 %v2008
    %v2010 = vpop.f32.mrf.mxu0
    %v2011 = vadd.f32 %v1952, %v2010
    %2012 = vdwg.mxu0
    %v2013 = vand.u32 %v98, 4294901760
    %2014 = vmatpush.msra.mxu0 %v2013
    %v2015 = vand.u32 %v97, 4294901760
    %2016 = vmatpush.msra.mxu0 %v2015
    %v2017 = vand.u32 %v96, 4294901760
    %2018 = vmatpush.msra.mxu0 %v2017
    %v2019 = vand.u32 %v95, 4294901760
    %2020 = vmatpush.msra.mxu0 %v2019
    %v2021 = vand.u32 %v94, 4294901760
    %2022 = vmatpush.msra.mxu0 %v2021
    %v2023 = vand.u32 %v93, 4294901760
    %2024 = vmatpush.msra.mxu0 %v2023
    %v2025 = vand.u32 %v92, 4294901760
    %2026 = vmatpush.msra.mxu0 %v2025
    %v2027 = vand.u32 %v91, 4294901760
    %2028 = vmatpush.msra.mxu0 %v2027
    %v2029 = vand.u32 %v90, 4294901760
    %2030 = vmatpush.msra.mxu0 %v2029
    %v2031 = vand.u32 %v89, 4294901760
    %2032 = vmatpush.msra.mxu0 %v2031
    %v2033 = vand.u32 %v88, 4294901760
    %2034 = vmatpush.msra.mxu0 %v2033
    %v2035 = vand.u32 %v87, 4294901760
    %2036 = vmatpush.msra.mxu0 %v2035
    %v2037 = vand.u32 %v86, 4294901760
    %2038 = vmatpush.msra.mxu0 %v2037
    %v2039 = vand.u32 %v85, 4294901760
    %2040 = vmatpush.msra.mxu0 %v2039
    %v2041 = vand.u32 %v84, 4294901760
    %2042 = vmatpush.msra.mxu0 %v2041
    %v2043 = vand.u32 %v83, 4294901760
    %2044 = vmatpush.msra.mxu0 %v2043
    %v2045 = vand.u32 %v1798, 4294901760
    %v2046 = vsub.f32 %v1798, %v2045
    %v2047 = vand.u32 %v2046, 4294901760
    %2048 = vmatmul.f32.gmra.mxu0 %v2047
    %v2049 = vpop.f32.mrf.mxu0
    %v2050 = vadd.f32 %v2006, %v2049
    %v2051 = vand.u32 %v1799, 4294901760
    %v2052 = vsub.f32 %v1799, %v2051
    %v2053 = vand.u32 %v2052, 4294901760
    %2054 = vmatmul.f32.gmra.mxu0 %v2053
    %v2055 = vpop.f32.mrf.mxu0
    %v2056 = vadd.f32 %v2011, %v2055
    %2057 = vdwg.mxu0
    %v2058 = vand.u32 %v98, 4294901760
    %v2059 = vsub.f32 %v98, %v2058
    %v2060 = vand.u32 %v2059, 4294901760
    %2061 = vmatpush.msra.mxu0 %v2060
    %v2062 = vand.u32 %v97, 4294901760
    %v2063 = vsub.f32 %v97, %v2062
    %v2064 = vand.u32 %v2063, 4294901760
    %2065 = vmatpush.msra.mxu0 %v2064
    %v2066 = vand.u32 %v96, 4294901760
    %v2067 = vsub.f32 %v96, %v2066
    %v2068 = vand.u32 %v2067, 4294901760
    %2069 = vmatpush.msra.mxu0 %v2068
    %v2070 = vand.u32 %v95, 4294901760
    %v2071 = vsub.f32 %v95, %v2070
    %v2072 = vand.u32 %v2071, 4294901760
    %2073 = vmatpush.msra.mxu0 %v2072
    %v2074 = vand.u32 %v94, 4294901760
    %v2075 = vsub.f32 %v94, %v2074
    %v2076 = vand.u32 %v2075, 4294901760
    %2077 = vmatpush.msra.mxu0 %v2076
    %v2078 = vand.u32 %v93, 4294901760
    %v2079 = vsub.f32 %v93, %v2078
    %v2080 = vand.u32 %v2079, 4294901760
    %2081 = vmatpush.msra.mxu0 %v2080
    %v2082 = vand.u32 %v92, 4294901760
    %v2083 = vsub.f32 %v92, %v2082
    %v2084 = vand.u32 %v2083, 4294901760
    %2085 = vmatpush.msra.mxu0 %v2084
    %v2086 = vand.u32 %v91, 4294901760
    %v2087 = vsub.f32 %v91, %v2086
    %v2088 = vand.u32 %v2087, 4294901760
    %2089 = vmatpush.msra.mxu0 %v2088
    %v2090 = vand.u32 %v90, 4294901760
    %v2091 = vsub.f32 %v90, %v2090
    %v2092 = vand.u32 %v2091, 4294901760
    %2093 = vmatpush.msra.mxu0 %v2092
    %v2094 = vand.u32 %v89, 4294901760
    %v2095 = vsub.f32 %v89, %v2094
    %v2096 = vand.u32 %v2095, 4294901760
    %2097 = vmatpush.msra.mxu0 %v2096
    %v2098 = vand.u32 %v88, 4294901760
    %v2099 = vsub.f32 %v88, %v2098
    %v2100 = vand.u32 %v2099, 4294901760
    %2101 = vmatpush.msra.mxu0 %v2100
    %v2102 = vand.u32 %v87, 4294901760
    %v2103 = vsub.f32 %v87, %v2102
    %v2104 = vand.u32 %v2103, 4294901760
    %2105 = vmatpush.msra.mxu0 %v2104
    %v2106 = vand.u32 %v86, 4294901760
    %v2107 = vsub.f32 %v86, %v2106
    %v2108 = vand.u32 %v2107, 4294901760
    %2109 = vmatpush.msra.mxu0 %v2108
    %v2110 = vand.u32 %v85, 4294901760
    %v2111 = vsub.f32 %v85, %v2110
    %v2112 = vand.u32 %v2111, 4294901760
    %2113 = vmatpush.msra.mxu0 %v2112
    %v2114 = vand.u32 %v84, 4294901760
    %v2115 = vsub.f32 %v84, %v2114
    %v2116 = vand.u32 %v2115, 4294901760
    %2117 = vmatpush.msra.mxu0 %v2116
    %v2118 = vand.u32 %v83, 4294901760
    %v2119 = vsub.f32 %v83, %v2118
    %v2120 = vand.u32 %v2119, 4294901760
    %2121 = vmatpush.msra.mxu0 %v2120
    %v2122 = vand.u32 %v1798, 4294901760
    %2123 = vmatmul.f32.gmra.mxu0 %v2122
    %v2124 = vpop.f32.mrf.mxu0
    %v2125 = vadd.f32 %v2050, %v2124
    %v2126 = vand.u32 %v1799, 4294901760
    %2127 = vmatmul.f32.gmra.mxu0 %v2126
    %v2128 = vpop.f32.mrf.mxu0
    %v2129 = vadd.f32 %v2056, %v2128
    %2130 = vdwg.mxu0
    %v2131 = vand.u32 %v98, 4294901760
    %2132 = vmatpush.msra.mxu0 %v2131
    %v2133 = vand.u32 %v97, 4294901760
    %2134 = vmatpush.msra.mxu0 %v2133
    %v2135 = vand.u32 %v96, 4294901760
    %2136 = vmatpush.msra.mxu0 %v2135
    %v2137 = vand.u32 %v95, 4294901760
    %2138 = vmatpush.msra.mxu0 %v2137
    %v2139 = vand.u32 %v94, 4294901760
    %2140 = vmatpush.msra.mxu0 %v2139
    %v2141 = vand.u32 %v93, 4294901760
    %2142 = vmatpush.msra.mxu0 %v2141
    %v2143 = vand.u32 %v92, 4294901760
    %2144 = vmatpush.msra.mxu0 %v2143
    %v2145 = vand.u32 %v91, 4294901760
    %2146 = vmatpush.msra.mxu0 %v2145
    %v2147 = vand.u32 %v90, 4294901760
    %2148 = vmatpush.msra.mxu0 %v2147
    %v2149 = vand.u32 %v89, 4294901760
    %2150 = vmatpush.msra.mxu0 %v2149
    %v2151 = vand.u32 %v88, 4294901760
    %2152 = vmatpush.msra.mxu0 %v2151
    %v2153 = vand.u32 %v87, 4294901760
    %2154 = vmatpush.msra.mxu0 %v2153
    %v2155 = vand.u32 %v86, 4294901760
    %2156 = vmatpush.msra.mxu0 %v2155
    %v2157 = vand.u32 %v85, 4294901760
    %2158 = vmatpush.msra.mxu0 %v2157
    %v2159 = vand.u32 %v84, 4294901760
    %2160 = vmatpush.msra.mxu0 %v2159
    %v2161 = vand.u32 %v83, 4294901760
    %2162 = vmatpush.msra.mxu0 %v2161
    %v2163 = vand.u32 %v1798, 4294901760
    %2164 = vmatmul.f32.gmra.mxu0 %v2163
    %v2165 = vpop.f32.mrf.mxu0
    %v2166 = vadd.f32 %v2125, %v2165
    %v2167 = vand.u32 %v1799, 4294901760
    %2168 = vmatmul.f32.gmra.mxu0 %v2167
    %v2169 = vpop.f32.mrf.mxu0
    %v2170 = vadd.f32 %v2129, %v2169
    %2171 = vdwg.mxu0
    %2172 = vmatpush.msra.mxu0 0.0
    %2173 = vmatpush.msra.mxu0 0.0
    %2174 = vmatpush.msra.mxu0 0.0
    %2175 = vmatpush.msra.mxu0 0.0
    %2176 = vmatpush.msra.mxu0 0.0
    %2177 = vmatpush.msra.mxu0 0.0
    %2178 = vmatpush.msra.mxu0 0.0
    %2179 = vmatpush.msra.mxu0 0.0
    %2180 = vmatpush.msra.mxu0 0.0
    %2181 = vmatpush.msra.mxu0 0.0
    %2182 = vmatpush.msra.mxu0 0.0
    %2183 = vmatpush.msra.mxu0 0.0
    %2184 = vmatpush.msra.mxu0 0.0
    %2185 = vmatpush.msra.mxu0 0.0
    %v2186 = vand.u32 %v2170, 4294901760
    %2187 = vmatpush.msra.mxu0 %v2186
    %v2188 = vand.u32 %v2166, 4294901760
    %2189 = vmatpush.msra.mxu0 %v2188
    %v2190 = vand.u32 %v477, 4294901760
    %v2191 = vsub.f32 %v477, %v2190
    %v2192 = vand.u32 %v2191, 4294901760
    %v2193 = vsub.f32 %v2191, %v2192
    %v2194 = vand.u32 %v2193, 4294901760
    %2195 = vmatmul.f32.gmra.mxu0 %v2194
    %v2196 = vpop.f32.mrf.mxu0
    %v2197 = vadd.f32 0.0, %v2196
    %v2198 = vand.u32 %v480, 4294901760
    %v2199 = vsub.f32 %v480, %v2198
    %v2200 = vand.u32 %v2199, 4294901760
    %v2201 = vsub.f32 %v2199, %v2200
    %v2202 = vand.u32 %v2201, 4294901760
    %2203 = vmatmul.f32.gmra.mxu0 %v2202
    %v2204 = vpop.f32.mrf.mxu0
    %v2205 = vadd.f32 0.0, %v2204
    %2206 = vdwg.mxu0
    %2207 = vmatpush.msra.mxu0 0.0
    %2208 = vmatpush.msra.mxu0 0.0
    %2209 = vmatpush.msra.mxu0 0.0
    %2210 = vmatpush.msra.mxu0 0.0
    %2211 = vmatpush.msra.mxu0 0.0
    %2212 = vmatpush.msra.mxu0 0.0
    %2213 = vmatpush.msra.mxu0 0.0
    %2214 = vmatpush.msra.mxu0 0.0
    %2215 = vmatpush.msra.mxu0 0.0
    %2216 = vmatpush.msra.mxu0 0.0
    %2217 = vmatpush.msra.mxu0 0.0
    %2218 = vmatpush.msra.mxu0 0.0
    %2219 = vmatpush.msra.mxu0 0.0
    %2220 = vmatpush.msra.mxu0 0.0
    %v2221 = vand.u32 %v2170, 4294901760
    %v2222 = vsub.f32 %v2170, %v2221
    %v2223 = vand.u32 %v2222, 4294901760
    %v2224 = vsub.f32 %v2222, %v2223
    %v2225 = vand.u32 %v2224, 4294901760
    %2226 = vmatpush.msra.mxu0 %v2225
    %v2227 = vand.u32 %v2166, 4294901760
    %v2228 = vsub.f32 %v2166, %v2227
    %v2229 = vand.u32 %v2228, 4294901760
    %v2230 = vsub.f32 %v2228, %v2229
    %v2231 = vand.u32 %v2230, 4294901760
    %2232 = vmatpush.msra.mxu0 %v2231
    %v2233 = vand.u32 %v477, 4294901760
    %2234 = vmatmul.f32.gmra.mxu0 %v2233
    %v2235 = vpop.f32.mrf.mxu0
    %v2236 = vadd.f32 %v2197, %v2235
    %v2237 = vand.u32 %v480, 4294901760
    %2238 = vmatmul.f32.gmra.mxu0 %v2237
    %v2239 = vpop.f32.mrf.mxu0
    %v2240 = vadd.f32 %v2205, %v2239
    %2241 = vdwg.mxu0
    %2242 = vmatpush.msra.mxu0 0.0
    %2243 = vmatpush.msra.mxu0 0.0
    %2244 = vmatpush.msra.mxu0 0.0
    %2245 = vmatpush.msra.mxu0 0.0
    %2246 = vmatpush.msra.mxu0 0.0
    %2247 = vmatpush.msra.mxu0 0.0
    %2248 = vmatpush.msra.mxu0 0.0
    %2249 = vmatpush.msra.mxu0 0.0
    %2250 = vmatpush.msra.mxu0 0.0
    %2251 = vmatpush.msra.mxu0 0.0
    %2252 = vmatpush.msra.mxu0 0.0
    %2253 = vmatpush.msra.mxu0 0.0
    %2254 = vmatpush.msra.mxu0 0.0
    %2255 = vmatpush.msra.mxu0 0.0
    %v2256 = vand.u32 %v2170, 4294901760
    %v2257 = vsub.f32 %v2170, %v2256
    %2258 = vmatpush.msra.mxu0 %v2257
    %v2259 = vand.u32 %v2166, 4294901760
    %v2260 = vsub.f32 %v2166, %v2259
    %2261 = vmatpush.msra.mxu0 %v2260
    %v2262 = vand.u32 %v477, 4294901760
    %v2263 = vsub.f32 %v477, %v2262
    %2264 = vmatmul.f32.gmra.mxu0 %v2263
    %v2265 = vpop.f32.mrf.mxu0
    %v2266 = vadd.f32 %v2236, %v2265
    %v2267 = vand.u32 %v480, 4294901760
    %v2268 = vsub.f32 %v480, %v2267
    %2269 = vmatmul.f32.gmra.mxu0 %v2268
    %v2270 = vpop.f32.mrf.mxu0
    %v2271 = vadd.f32 %v2240, %v2270
    %2272 = vdwg.mxu0
    %2273 = vmatpush.msra.mxu0 0.0
    %2274 = vmatpush.msra.mxu0 0.0
    %2275 = vmatpush.msra.mxu0 0.0
    %2276 = vmatpush.msra.mxu0 0.0
    %2277 = vmatpush.msra.mxu0 0.0
    %2278 = vmatpush.msra.mxu0 0.0
    %2279 = vmatpush.msra.mxu0 0.0
    %2280 = vmatpush.msra.mxu0 0.0
    %2281 = vmatpush.msra.mxu0 0.0
    %2282 = vmatpush.msra.mxu0 0.0
    %2283 = vmatpush.msra.mxu0 0.0
    %2284 = vmatpush.msra.mxu0 0.0
    %2285 = vmatpush.msra.mxu0 0.0
    %2286 = vmatpush.msra.mxu0 0.0
    %v2287 = vand.u32 %v2170, 4294901760
    %2288 = vmatpush.msra.mxu0 %v2287
    %v2289 = vand.u32 %v2166, 4294901760
    %2290 = vmatpush.msra.mxu0 %v2289
    %v2291 = vand.u32 %v477, 4294901760
    %v2292 = vsub.f32 %v477, %v2291
    %v2293 = vand.u32 %v2292, 4294901760
    %2294 = vmatmul.f32.gmra.mxu0 %v2293
    %v2295 = vpop.f32.mrf.mxu0
    %v2296 = vadd.f32 %v2266, %v2295
    %v2297 = vand.u32 %v480, 4294901760
    %v2298 = vsub.f32 %v480, %v2297
    %v2299 = vand.u32 %v2298, 4294901760
    %2300 = vmatmul.f32.gmra.mxu0 %v2299
    %v2301 = vpop.f32.mrf.mxu0
    %v2302 = vadd.f32 %v2271, %v2301
    %2303 = vdwg.mxu0
    %2304 = vmatpush.msra.mxu0 0.0
    %2305 = vmatpush.msra.mxu0 0.0
    %2306 = vmatpush.msra.mxu0 0.0
    %2307 = vmatpush.msra.mxu0 0.0
    %2308 = vmatpush.msra.mxu0 0.0
    %2309 = vmatpush.msra.mxu0 0.0
    %2310 = vmatpush.msra.mxu0 0.0
    %2311 = vmatpush.msra.mxu0 0.0
    %2312 = vmatpush.msra.mxu0 0.0
    %2313 = vmatpush.msra.mxu0 0.0
    %2314 = vmatpush.msra.mxu0 0.0
    %2315 = vmatpush.msra.mxu0 0.0
    %2316 = vmatpush.msra.mxu0 0.0
    %2317 = vmatpush.msra.mxu0 0.0
    %v2318 = vand.u32 %v2170, 4294901760
    %v2319 = vsub.f32 %v2170, %v2318
    %v2320 = vand.u32 %v2319, 4294901760
    %2321 = vmatpush.msra.mxu0 %v2320
    %v2322 = vand.u32 %v2166, 4294901760
    %v2323 = vsub.f32 %v2166, %v2322
    %v2324 = vand.u32 %v2323, 4294901760
    %2325 = vmatpush.msra.mxu0 %v2324
    %v2326 = vand.u32 %v477, 4294901760
    %2327 = vmatmul.f32.gmra.mxu0 %v2326
    %v2328 = vpop.f32.mrf.mxu0
    %v2329 = vadd.f32 %v2296, %v2328
    %v2330 = vand.u32 %v480, 4294901760
    %2331 = vmatmul.f32.gmra.mxu0 %v2330
    %v2332 = vpop.f32.mrf.mxu0
    %v2333 = vadd.f32 %v2302, %v2332
    %2334 = vdwg.mxu0
    %2335 = vmatpush.msra.mxu0 0.0
    %2336 = vmatpush.msra.mxu0 0.0
    %2337 = vmatpush.msra.mxu0 0.0
    %2338 = vmatpush.msra.mxu0 0.0
    %2339 = vmatpush.msra.mxu0 0.0
    %2340 = vmatpush.msra.mxu0 0.0
    %2341 = vmatpush.msra.mxu0 0.0
    %2342 = vmatpush.msra.mxu0 0.0
    %2343 = vmatpush.msra.mxu0 0.0
    %2344 = vmatpush.msra.mxu0 0.0
    %2345 = vmatpush.msra.mxu0 0.0
    %2346 = vmatpush.msra.mxu0 0.0
    %2347 = vmatpush.msra.mxu0 0.0
    %2348 = vmatpush.msra.mxu0 0.0
    %v2349 = vand.u32 %v2170, 4294901760
    %2350 = vmatpush.msra.mxu0 %v2349
    %v2351 = vand.u32 %v2166, 4294901760
    %2352 = vmatpush.msra.mxu0 %v2351
    %v2353 = vand.u32 %v477, 4294901760
    %2354 = vmatmul.f32.gmra.mxu0 %v2353
    %v2355 = vpop.f32.mrf.mxu0
    %v2356 = vadd.f32 %v2329, %v2355
    %v2357 = vand.u32 %v480, 4294901760
    %2358 = vmatmul.f32.gmra.mxu0 %v2357
    %v2359 = vpop.f32.mrf.mxu0
    %v2360 = vadd.f32 %v2333, %v2359
    %2361 = vdwg.mxu0
    %v2362 = vmul.f32 %v99, %v101
    %v2363 = vmul.f32 %v100, %v102
    %v2364 = vand.u32 %v98, 4294901760
    %2365 = vmatpush.msra.mxu0 %v2364
    %v2366 = vand.u32 %v97, 4294901760
    %2367 = vmatpush.msra.mxu0 %v2366
    %v2368 = vand.u32 %v96, 4294901760
    %2369 = vmatpush.msra.mxu0 %v2368
    %v2370 = vand.u32 %v95, 4294901760
    %2371 = vmatpush.msra.mxu0 %v2370
    %v2372 = vand.u32 %v94, 4294901760
    %2373 = vmatpush.msra.mxu0 %v2372
    %v2374 = vand.u32 %v93, 4294901760
    %2375 = vmatpush.msra.mxu0 %v2374
    %v2376 = vand.u32 %v92, 4294901760
    %2377 = vmatpush.msra.mxu0 %v2376
    %v2378 = vand.u32 %v91, 4294901760
    %2379 = vmatpush.msra.mxu0 %v2378
    %v2380 = vand.u32 %v90, 4294901760
    %2381 = vmatpush.msra.mxu0 %v2380
    %v2382 = vand.u32 %v89, 4294901760
    %2383 = vmatpush.msra.mxu0 %v2382
    %v2384 = vand.u32 %v88, 4294901760
    %2385 = vmatpush.msra.mxu0 %v2384
    %v2386 = vand.u32 %v87, 4294901760
    %2387 = vmatpush.msra.mxu0 %v2386
    %v2388 = vand.u32 %v86, 4294901760
    %2389 = vmatpush.msra.mxu0 %v2388
    %v2390 = vand.u32 %v85, 4294901760
    %2391 = vmatpush.msra.mxu0 %v2390
    %v2392 = vand.u32 %v84, 4294901760
    %2393 = vmatpush.msra.mxu0 %v2392
    %v2394 = vand.u32 %v83, 4294901760
    %2395 = vmatpush.msra.mxu0 %v2394
    %v2396 = vand.u32 %v2362, 4294901760
    %v2397 = vsub.f32 %v2362, %v2396
    %v2398 = vand.u32 %v2397, 4294901760
    %v2399 = vsub.f32 %v2397, %v2398
    %v2400 = vand.u32 %v2399, 4294901760
    %2401 = vmatmul.f32.gmra.mxu0 %v2400
    %v2402 = vpop.f32.mrf.mxu0
    %v2403 = vadd.f32 0.0, %v2402
    %v2404 = vand.u32 %v2363, 4294901760
    %v2405 = vsub.f32 %v2363, %v2404
    %v2406 = vand.u32 %v2405, 4294901760
    %v2407 = vsub.f32 %v2405, %v2406
    %v2408 = vand.u32 %v2407, 4294901760
    %2409 = vmatmul.f32.gmra.mxu0 %v2408
    %v2410 = vpop.f32.mrf.mxu0
    %v2411 = vadd.f32 0.0, %v2410
    %2412 = vdwg.mxu0
    %v2413 = vand.u32 %v98, 4294901760
    %v2414 = vsub.f32 %v98, %v2413
    %v2415 = vand.u32 %v2414, 4294901760
    %v2416 = vsub.f32 %v2414, %v2415
    %v2417 = vand.u32 %v2416, 4294901760
    %2418 = vmatpush.msra.mxu0 %v2417
    %v2419 = vand.u32 %v97, 4294901760
    %v2420 = vsub.f32 %v97, %v2419
    %v2421 = vand.u32 %v2420, 4294901760
    %v2422 = vsub.f32 %v2420, %v2421
    %v2423 = vand.u32 %v2422, 4294901760
    %2424 = vmatpush.msra.mxu0 %v2423
    %v2425 = vand.u32 %v96, 4294901760
    %v2426 = vsub.f32 %v96, %v2425
    %v2427 = vand.u32 %v2426, 4294901760
    %v2428 = vsub.f32 %v2426, %v2427
    %v2429 = vand.u32 %v2428, 4294901760
    %2430 = vmatpush.msra.mxu0 %v2429
    %v2431 = vand.u32 %v95, 4294901760
    %v2432 = vsub.f32 %v95, %v2431
    %v2433 = vand.u32 %v2432, 4294901760
    %v2434 = vsub.f32 %v2432, %v2433
    %v2435 = vand.u32 %v2434, 4294901760
    %2436 = vmatpush.msra.mxu0 %v2435
    %v2437 = vand.u32 %v94, 4294901760
    %v2438 = vsub.f32 %v94, %v2437
    %v2439 = vand.u32 %v2438, 4294901760
    %v2440 = vsub.f32 %v2438, %v2439
    %v2441 = vand.u32 %v2440, 4294901760
    %2442 = vmatpush.msra.mxu0 %v2441
    %v2443 = vand.u32 %v93, 4294901760
    %v2444 = vsub.f32 %v93, %v2443
    %v2445 = vand.u32 %v2444, 4294901760
    %v2446 = vsub.f32 %v2444, %v2445
    %v2447 = vand.u32 %v2446, 4294901760
    %2448 = vmatpush.msra.mxu0 %v2447
    %v2449 = vand.u32 %v92, 4294901760
    %v2450 = vsub.f32 %v92, %v2449
    %v2451 = vand.u32 %v2450, 4294901760
    %v2452 = vsub.f32 %v2450, %v2451
    %v2453 = vand.u32 %v2452, 4294901760
    %2454 = vmatpush.msra.mxu0 %v2453
    %v2455 = vand.u32 %v91, 4294901760
    %v2456 = vsub.f32 %v91, %v2455
    %v2457 = vand.u32 %v2456, 4294901760
    %v2458 = vsub.f32 %v2456, %v2457
    %v2459 = vand.u32 %v2458, 4294901760
    %2460 = vmatpush.msra.mxu0 %v2459
    %v2461 = vand.u32 %v90, 4294901760
    %v2462 = vsub.f32 %v90, %v2461
    %v2463 = vand.u32 %v2462, 4294901760
    %v2464 = vsub.f32 %v2462, %v2463
    %v2465 = vand.u32 %v2464, 4294901760
    %2466 = vmatpush.msra.mxu0 %v2465
    %v2467 = vand.u32 %v89, 4294901760
    %v2468 = vsub.f32 %v89, %v2467
    %v2469 = vand.u32 %v2468, 4294901760
    %v2470 = vsub.f32 %v2468, %v2469
    %v2471 = vand.u32 %v2470, 4294901760
    %2472 = vmatpush.msra.mxu0 %v2471
    %v2473 = vand.u32 %v88, 4294901760
    %v2474 = vsub.f32 %v88, %v2473
    %v2475 = vand.u32 %v2474, 4294901760
    %v2476 = vsub.f32 %v2474, %v2475
    %v2477 = vand.u32 %v2476, 4294901760
    %2478 = vmatpush.msra.mxu0 %v2477
    %v2479 = vand.u32 %v87, 4294901760
    %v2480 = vsub.f32 %v87, %v2479
    %v2481 = vand.u32 %v2480, 4294901760
    %v2482 = vsub.f32 %v2480, %v2481
    %v2483 = vand.u32 %v2482, 4294901760
    %2484 = vmatpush.msra.mxu0 %v2483
    %v2485 = vand.u32 %v86, 4294901760
    %v2486 = vsub.f32 %v86, %v2485
    %v2487 = vand.u32 %v2486, 4294901760
    %v2488 = vsub.f32 %v2486, %v2487
    %v2489 = vand.u32 %v2488, 4294901760
    %2490 = vmatpush.msra.mxu0 %v2489
    %v2491 = vand.u32 %v85, 4294901760
    %v2492 = vsub.f32 %v85, %v2491
    %v2493 = vand.u32 %v2492, 4294901760
    %v2494 = vsub.f32 %v2492, %v2493
    %v2495 = vand.u32 %v2494, 4294901760
    %2496 = vmatpush.msra.mxu0 %v2495
    %v2497 = vand.u32 %v84, 4294901760
    %v2498 = vsub.f32 %v84, %v2497
    %v2499 = vand.u32 %v2498, 4294901760
    %v2500 = vsub.f32 %v2498, %v2499
    %v2501 = vand.u32 %v2500, 4294901760
    %2502 = vmatpush.msra.mxu0 %v2501
    %v2503 = vand.u32 %v83, 4294901760
    %v2504 = vsub.f32 %v83, %v2503
    %v2505 = vand.u32 %v2504, 4294901760
    %v2506 = vsub.f32 %v2504, %v2505
    %v2507 = vand.u32 %v2506, 4294901760
    %2508 = vmatpush.msra.mxu0 %v2507
    %v2509 = vand.u32 %v2362, 4294901760
    %2510 = vmatmul.f32.gmra.mxu0 %v2509
    %v2511 = vpop.f32.mrf.mxu0
    %v2512 = vadd.f32 %v2403, %v2511
    %v2513 = vand.u32 %v2363, 4294901760
    %2514 = vmatmul.f32.gmra.mxu0 %v2513
    %v2515 = vpop.f32.mrf.mxu0
    %v2516 = vadd.f32 %v2411, %v2515
    %2517 = vdwg.mxu0
    %v2518 = vand.u32 %v98, 4294901760
    %v2519 = vsub.f32 %v98, %v2518
    %2520 = vmatpush.msra.mxu0 %v2519
    %v2521 = vand.u32 %v97, 4294901760
    %v2522 = vsub.f32 %v97, %v2521
    %2523 = vmatpush.msra.mxu0 %v2522
    %v2524 = vand.u32 %v96, 4294901760
    %v2525 = vsub.f32 %v96, %v2524
    %2526 = vmatpush.msra.mxu0 %v2525
    %v2527 = vand.u32 %v95, 4294901760
    %v2528 = vsub.f32 %v95, %v2527
    %2529 = vmatpush.msra.mxu0 %v2528
    %v2530 = vand.u32 %v94, 4294901760
    %v2531 = vsub.f32 %v94, %v2530
    %2532 = vmatpush.msra.mxu0 %v2531
    %v2533 = vand.u32 %v93, 4294901760
    %v2534 = vsub.f32 %v93, %v2533
    %2535 = vmatpush.msra.mxu0 %v2534
    %v2536 = vand.u32 %v92, 4294901760
    %v2537 = vsub.f32 %v92, %v2536
    %2538 = vmatpush.msra.mxu0 %v2537
    %v2539 = vand.u32 %v91, 4294901760
    %v2540 = vsub.f32 %v91, %v2539
    %2541 = vmatpush.msra.mxu0 %v2540
    %v2542 = vand.u32 %v90, 4294901760
    %v2543 = vsub.f32 %v90, %v2542
    %2544 = vmatpush.msra.mxu0 %v2543
    %v2545 = vand.u32 %v89, 4294901760
    %v2546 = vsub.f32 %v89, %v2545
    %2547 = vmatpush.msra.mxu0 %v2546
    %v2548 = vand.u32 %v88, 4294901760
    %v2549 = vsub.f32 %v88, %v2548
    %2550 = vmatpush.msra.mxu0 %v2549
    %v2551 = vand.u32 %v87, 4294901760
    %v2552 = vsub.f32 %v87, %v2551
    %2553 = vmatpush.msra.mxu0 %v2552
    %v2554 = vand.u32 %v86, 4294901760
    %v2555 = vsub.f32 %v86, %v2554
    %2556 = vmatpush.msra.mxu0 %v2555
    %v2557 = vand.u32 %v85, 4294901760
    %v2558 = vsub.f32 %v85, %v2557
    %2559 = vmatpush.msra.mxu0 %v2558
    %v2560 = vand.u32 %v84, 4294901760
    %v2561 = vsub.f32 %v84, %v2560
    %2562 = vmatpush.msra.mxu0 %v2561
    %v2563 = vand.u32 %v83, 4294901760
    %v2564 = vsub.f32 %v83, %v2563
    %2565 = vmatpush.msra.mxu0 %v2564
    %v2566 = vand.u32 %v2362, 4294901760
    %v2567 = vsub.f32 %v2362, %v2566
    %2568 = vmatmul.f32.gmra.mxu0 %v2567
    %v2569 = vpop.f32.mrf.mxu0
    %v2570 = vadd.f32 %v2512, %v2569
    %v2571 = vand.u32 %v2363, 4294901760
    %v2572 = vsub.f32 %v2363, %v2571
    %2573 = vmatmul.f32.gmra.mxu0 %v2572
    %v2574 = vpop.f32.mrf.mxu0
    %v2575 = vadd.f32 %v2516, %v2574
    %2576 = vdwg.mxu0
    %v2577 = vand.u32 %v98, 4294901760
    %2578 = vmatpush.msra.mxu0 %v2577
    %v2579 = vand.u32 %v97, 4294901760
    %2580 = vmatpush.msra.mxu0 %v2579
    %v2581 = vand.u32 %v96, 4294901760
    %2582 = vmatpush.msra.mxu0 %v2581
    %v2583 = vand.u32 %v95, 4294901760
    %2584 = vmatpush.msra.mxu0 %v2583
    %v2585 = vand.u32 %v94, 4294901760
    %2586 = vmatpush.msra.mxu0 %v2585
    %v2587 = vand.u32 %v93, 4294901760
    %2588 = vmatpush.msra.mxu0 %v2587
    %v2589 = vand.u32 %v92, 4294901760
    %2590 = vmatpush.msra.mxu0 %v2589
    %v2591 = vand.u32 %v91, 4294901760
    %2592 = vmatpush.msra.mxu0 %v2591
    %v2593 = vand.u32 %v90, 4294901760
    %2594 = vmatpush.msra.mxu0 %v2593
    %v2595 = vand.u32 %v89, 4294901760
    %2596 = vmatpush.msra.mxu0 %v2595
    %v2597 = vand.u32 %v88, 4294901760
    %2598 = vmatpush.msra.mxu0 %v2597
    %v2599 = vand.u32 %v87, 4294901760
    %2600 = vmatpush.msra.mxu0 %v2599
    %v2601 = vand.u32 %v86, 4294901760
    %2602 = vmatpush.msra.mxu0 %v2601
    %v2603 = vand.u32 %v85, 4294901760
    %2604 = vmatpush.msra.mxu0 %v2603
    %v2605 = vand.u32 %v84, 4294901760
    %2606 = vmatpush.msra.mxu0 %v2605
    %v2607 = vand.u32 %v83, 4294901760
    %2608 = vmatpush.msra.mxu0 %v2607
    %v2609 = vand.u32 %v2362, 4294901760
    %v2610 = vsub.f32 %v2362, %v2609
    %v2611 = vand.u32 %v2610, 4294901760
    %2612 = vmatmul.f32.gmra.mxu0 %v2611
    %v2613 = vpop.f32.mrf.mxu0
    %v2614 = vadd.f32 %v2570, %v2613
    %v2615 = vand.u32 %v2363, 4294901760
    %v2616 = vsub.f32 %v2363, %v2615
    %v2617 = vand.u32 %v2616, 4294901760
    %2618 = vmatmul.f32.gmra.mxu0 %v2617
    %v2619 = vpop.f32.mrf.mxu0
    %v2620 = vadd.f32 %v2575, %v2619
    %2621 = vdwg.mxu0
    %v2622 = vand.u32 %v98, 4294901760
    %v2623 = vsub.f32 %v98, %v2622
    %v2624 = vand.u32 %v2623, 4294901760
    %2625 = vmatpush.msra.mxu0 %v2624
    %v2626 = vand.u32 %v97, 4294901760
    %v2627 = vsub.f32 %v97, %v2626
    %v2628 = vand.u32 %v2627, 4294901760
    %2629 = vmatpush.msra.mxu0 %v2628
    %v2630 = vand.u32 %v96, 4294901760
    %v2631 = vsub.f32 %v96, %v2630
    %v2632 = vand.u32 %v2631, 4294901760
    %2633 = vmatpush.msra.mxu0 %v2632
    %v2634 = vand.u32 %v95, 4294901760
    %v2635 = vsub.f32 %v95, %v2634
    %v2636 = vand.u32 %v2635, 4294901760
    %2637 = vmatpush.msra.mxu0 %v2636
    %v2638 = vand.u32 %v94, 4294901760
    %v2639 = vsub.f32 %v94, %v2638
    %v2640 = vand.u32 %v2639, 4294901760
    %2641 = vmatpush.msra.mxu0 %v2640
    %v2642 = vand.u32 %v93, 4294901760
    %v2643 = vsub.f32 %v93, %v2642
    %v2644 = vand.u32 %v2643, 4294901760
    %2645 = vmatpush.msra.mxu0 %v2644
    %v2646 = vand.u32 %v92, 4294901760
    %v2647 = vsub.f32 %v92, %v2646
    %v2648 = vand.u32 %v2647, 4294901760
    %2649 = vmatpush.msra.mxu0 %v2648
    %v2650 = vand.u32 %v91, 4294901760
    %v2651 = vsub.f32 %v91, %v2650
    %v2652 = vand.u32 %v2651, 4294901760
    %2653 = vmatpush.msra.mxu0 %v2652
    %v2654 = vand.u32 %v90, 4294901760
    %v2655 = vsub.f32 %v90, %v2654
    %v2656 = vand.u32 %v2655, 4294901760
    %2657 = vmatpush.msra.mxu0 %v2656
    %v2658 = vand.u32 %v89, 4294901760
    %v2659 = vsub.f32 %v89, %v2658
    %v2660 = vand.u32 %v2659, 4294901760
    %2661 = vmatpush.msra.mxu0 %v2660
    %v2662 = vand.u32 %v88, 4294901760
    %v2663 = vsub.f32 %v88, %v2662
    %v2664 = vand.u32 %v2663, 4294901760
    %2665 = vmatpush.msra.mxu0 %v2664
    %v2666 = vand.u32 %v87, 4294901760
    %v2667 = vsub.f32 %v87, %v2666
    %v2668 = vand.u32 %v2667, 4294901760
    %2669 = vmatpush.msra.mxu0 %v2668
    %v2670 = vand.u32 %v86, 4294901760
    %v2671 = vsub.f32 %v86, %v2670
    %v2672 = vand.u32 %v2671, 4294901760
    %2673 = vmatpush.msra.mxu0 %v2672
    %v2674 = vand.u32 %v85, 4294901760
    %v2675 = vsub.f32 %v85, %v2674
    %v2676 = vand.u32 %v2675, 4294901760
    %2677 = vmatpush.msra.mxu0 %v2676
    %v2678 = vand.u32 %v84, 4294901760
    %v2679 = vsub.f32 %v84, %v2678
    %v2680 = vand.u32 %v2679, 4294901760
    %2681 = vmatpush.msra.mxu0 %v2680
    %v2682 = vand.u32 %v83, 4294901760
    %v2683 = vsub.f32 %v83, %v2682
    %v2684 = vand.u32 %v2683, 4294901760
    %2685 = vmatpush.msra.mxu0 %v2684
    %v2686 = vand.u32 %v2362, 4294901760
    %2687 = vmatmul.f32.gmra.mxu0 %v2686
    %v2688 = vpop.f32.mrf.mxu0
    %v2689 = vadd.f32 %v2614, %v2688
    %v2690 = vand.u32 %v2363, 4294901760
    %2691 = vmatmul.f32.gmra.mxu0 %v2690
    %v2692 = vpop.f32.mrf.mxu0
    %v2693 = vadd.f32 %v2620, %v2692
    %2694 = vdwg.mxu0
    %v2695 = vand.u32 %v98, 4294901760
    %2696 = vmatpush.msra.mxu0 %v2695
    %v2697 = vand.u32 %v97, 4294901760
    %2698 = vmatpush.msra.mxu0 %v2697
    %v2699 = vand.u32 %v96, 4294901760
    %2700 = vmatpush.msra.mxu0 %v2699
    %v2701 = vand.u32 %v95, 4294901760
    %2702 = vmatpush.msra.mxu0 %v2701
    %v2703 = vand.u32 %v94, 4294901760
    %2704 = vmatpush.msra.mxu0 %v2703
    %v2705 = vand.u32 %v93, 4294901760
    %2706 = vmatpush.msra.mxu0 %v2705
    %v2707 = vand.u32 %v92, 4294901760
    %2708 = vmatpush.msra.mxu0 %v2707
    %v2709 = vand.u32 %v91, 4294901760
    %2710 = vmatpush.msra.mxu0 %v2709
    %v2711 = vand.u32 %v90, 4294901760
    %2712 = vmatpush.msra.mxu0 %v2711
    %v2713 = vand.u32 %v89, 4294901760
    %2714 = vmatpush.msra.mxu0 %v2713
    %v2715 = vand.u32 %v88, 4294901760
    %2716 = vmatpush.msra.mxu0 %v2715
    %v2717 = vand.u32 %v87, 4294901760
    %2718 = vmatpush.msra.mxu0 %v2717
    %v2719 = vand.u32 %v86, 4294901760
    %2720 = vmatpush.msra.mxu0 %v2719
    %v2721 = vand.u32 %v85, 4294901760
    %2722 = vmatpush.msra.mxu0 %v2721
    %v2723 = vand.u32 %v84, 4294901760
    %2724 = vmatpush.msra.mxu0 %v2723
    %v2725 = vand.u32 %v83, 4294901760
    %2726 = vmatpush.msra.mxu0 %v2725
    %v2727 = vand.u32 %v2362, 4294901760
    %2728 = vmatmul.f32.gmra.mxu0 %v2727
    %v2729 = vpop.f32.mrf.mxu0
    %v2730 = vadd.f32 %v2689, %v2729
    %v2731 = vand.u32 %v2363, 4294901760
    %2732 = vmatmul.f32.gmra.mxu0 %v2731
    %v2733 = vpop.f32.mrf.mxu0
    %v2734 = vadd.f32 %v2693, %v2733
    %2735 = vdwg.mxu0
    %2736 = vmatpush.msra.mxu0 0.0
    %2737 = vmatpush.msra.mxu0 0.0
    %2738 = vmatpush.msra.mxu0 0.0
    %2739 = vmatpush.msra.mxu0 0.0
    %2740 = vmatpush.msra.mxu0 0.0
    %2741 = vmatpush.msra.mxu0 0.0
    %2742 = vmatpush.msra.mxu0 0.0
    %2743 = vmatpush.msra.mxu0 0.0
    %2744 = vmatpush.msra.mxu0 0.0
    %2745 = vmatpush.msra.mxu0 0.0
    %2746 = vmatpush.msra.mxu0 0.0
    %2747 = vmatpush.msra.mxu0 0.0
    %2748 = vmatpush.msra.mxu0 0.0
    %2749 = vmatpush.msra.mxu0 0.0
    %v2750 = vand.u32 %v2734, 4294901760
    %2751 = vmatpush.msra.mxu0 %v2750
    %v2752 = vand.u32 %v2730, 4294901760
    %2753 = vmatpush.msra.mxu0 %v2752
    %v2754 = vand.u32 %v477, 4294901760
    %v2755 = vsub.f32 %v477, %v2754
    %v2756 = vand.u32 %v2755, 4294901760
    %v2757 = vsub.f32 %v2755, %v2756
    %v2758 = vand.u32 %v2757, 4294901760
    %2759 = vmatmul.f32.gmra.mxu0 %v2758
    %v2760 = vpop.f32.mrf.mxu0
    %v2761 = vadd.f32 0.0, %v2760
    %v2762 = vand.u32 %v480, 4294901760
    %v2763 = vsub.f32 %v480, %v2762
    %v2764 = vand.u32 %v2763, 4294901760
    %v2765 = vsub.f32 %v2763, %v2764
    %v2766 = vand.u32 %v2765, 4294901760
    %2767 = vmatmul.f32.gmra.mxu0 %v2766
    %v2768 = vpop.f32.mrf.mxu0
    %v2769 = vadd.f32 0.0, %v2768
    %2770 = vdwg.mxu0
    %2771 = vmatpush.msra.mxu0 0.0
    %2772 = vmatpush.msra.mxu0 0.0
    %2773 = vmatpush.msra.mxu0 0.0
    %2774 = vmatpush.msra.mxu0 0.0
    %2775 = vmatpush.msra.mxu0 0.0
    %2776 = vmatpush.msra.mxu0 0.0
    %2777 = vmatpush.msra.mxu0 0.0
    %2778 = vmatpush.msra.mxu0 0.0
    %2779 = vmatpush.msra.mxu0 0.0
    %2780 = vmatpush.msra.mxu0 0.0
    %2781 = vmatpush.msra.mxu0 0.0
    %2782 = vmatpush.msra.mxu0 0.0
    %2783 = vmatpush.msra.mxu0 0.0
    %2784 = vmatpush.msra.mxu0 0.0
    %v2785 = vand.u32 %v2734, 4294901760
    %v2786 = vsub.f32 %v2734, %v2785
    %v2787 = vand.u32 %v2786, 4294901760
    %v2788 = vsub.f32 %v2786, %v2787
    %v2789 = vand.u32 %v2788, 4294901760
    %2790 = vmatpush.msra.mxu0 %v2789
    %v2791 = vand.u32 %v2730, 4294901760
    %v2792 = vsub.f32 %v2730, %v2791
    %v2793 = vand.u32 %v2792, 4294901760
    %v2794 = vsub.f32 %v2792, %v2793
    %v2795 = vand.u32 %v2794, 4294901760
    %2796 = vmatpush.msra.mxu0 %v2795
    %v2797 = vand.u32 %v477, 4294901760
    %2798 = vmatmul.f32.gmra.mxu0 %v2797
    %v2799 = vpop.f32.mrf.mxu0
    %v2800 = vadd.f32 %v2761, %v2799
    %v2801 = vand.u32 %v480, 4294901760
    %2802 = vmatmul.f32.gmra.mxu0 %v2801
    %v2803 = vpop.f32.mrf.mxu0
    %v2804 = vadd.f32 %v2769, %v2803
    %2805 = vdwg.mxu0
    %2806 = vmatpush.msra.mxu0 0.0
    %2807 = vmatpush.msra.mxu0 0.0
    %2808 = vmatpush.msra.mxu0 0.0
    %2809 = vmatpush.msra.mxu0 0.0
    %2810 = vmatpush.msra.mxu0 0.0
    %2811 = vmatpush.msra.mxu0 0.0
    %2812 = vmatpush.msra.mxu0 0.0
    %2813 = vmatpush.msra.mxu0 0.0
    %2814 = vmatpush.msra.mxu0 0.0
    %2815 = vmatpush.msra.mxu0 0.0
    %2816 = vmatpush.msra.mxu0 0.0
    %2817 = vmatpush.msra.mxu0 0.0
    %2818 = vmatpush.msra.mxu0 0.0
    %2819 = vmatpush.msra.mxu0 0.0
    %v2820 = vand.u32 %v2734, 4294901760
    %v2821 = vsub.f32 %v2734, %v2820
    %2822 = vmatpush.msra.mxu0 %v2821
    %v2823 = vand.u32 %v2730, 4294901760
    %v2824 = vsub.f32 %v2730, %v2823
    %2825 = vmatpush.msra.mxu0 %v2824
    %v2826 = vand.u32 %v477, 4294901760
    %v2827 = vsub.f32 %v477, %v2826
    %2828 = vmatmul.f32.gmra.mxu0 %v2827
    %v2829 = vpop.f32.mrf.mxu0
    %v2830 = vadd.f32 %v2800, %v2829
    %v2831 = vand.u32 %v480, 4294901760
    %v2832 = vsub.f32 %v480, %v2831
    %2833 = vmatmul.f32.gmra.mxu0 %v2832
    %v2834 = vpop.f32.mrf.mxu0
    %v2835 = vadd.f32 %v2804, %v2834
    %2836 = vdwg.mxu0
    %2837 = vmatpush.msra.mxu0 0.0
    %2838 = vmatpush.msra.mxu0 0.0
    %2839 = vmatpush.msra.mxu0 0.0
    %2840 = vmatpush.msra.mxu0 0.0
    %2841 = vmatpush.msra.mxu0 0.0
    %2842 = vmatpush.msra.mxu0 0.0
    %2843 = vmatpush.msra.mxu0 0.0
    %2844 = vmatpush.msra.mxu0 0.0
    %2845 = vmatpush.msra.mxu0 0.0
    %2846 = vmatpush.msra.mxu0 0.0
    %2847 = vmatpush.msra.mxu0 0.0
    %2848 = vmatpush.msra.mxu0 0.0
    %2849 = vmatpush.msra.mxu0 0.0
    %2850 = vmatpush.msra.mxu0 0.0
    %v2851 = vand.u32 %v2734, 4294901760
    %2852 = vmatpush.msra.mxu0 %v2851
    %v2853 = vand.u32 %v2730, 4294901760
    %2854 = vmatpush.msra.mxu0 %v2853
    %v2855 = vand.u32 %v477, 4294901760
    %v2856 = vsub.f32 %v477, %v2855
    %v2857 = vand.u32 %v2856, 4294901760
    %2858 = vmatmul.f32.gmra.mxu0 %v2857
    %v2859 = vpop.f32.mrf.mxu0
    %v2860 = vadd.f32 %v2830, %v2859
    %v2861 = vand.u32 %v480, 4294901760
    %v2862 = vsub.f32 %v480, %v2861
    %v2863 = vand.u32 %v2862, 4294901760
    %2864 = vmatmul.f32.gmra.mxu0 %v2863
    %v2865 = vpop.f32.mrf.mxu0
    %v2866 = vadd.f32 %v2835, %v2865
    %2867 = vdwg.mxu0
    %2868 = vmatpush.msra.mxu0 0.0
    %2869 = vmatpush.msra.mxu0 0.0
    %2870 = vmatpush.msra.mxu0 0.0
    %2871 = vmatpush.msra.mxu0 0.0
    %2872 = vmatpush.msra.mxu0 0.0
    %2873 = vmatpush.msra.mxu0 0.0
    %2874 = vmatpush.msra.mxu0 0.0
    %2875 = vmatpush.msra.mxu0 0.0
    %2876 = vmatpush.msra.mxu0 0.0
    %2877 = vmatpush.msra.mxu0 0.0
    %2878 = vmatpush.msra.mxu0 0.0
    %2879 = vmatpush.msra.mxu0 0.0
    %2880 = vmatpush.msra.mxu0 0.0
    %2881 = vmatpush.msra.mxu0 0.0
    %v2882 = vand.u32 %v2734, 4294901760
    %v2883 = vsub.f32 %v2734, %v2882
    %v2884 = vand.u32 %v2883, 4294901760
    %2885 = vmatpush.msra.mxu0 %v2884
    %v2886 = vand.u32 %v2730, 4294901760
    %v2887 = vsub.f32 %v2730, %v2886
    %v2888 = vand.u32 %v2887, 4294901760
    %2889 = vmatpush.msra.mxu0 %v2888
    %v2890 = vand.u32 %v477, 4294901760
    %2891 = vmatmul.f32.gmra.mxu0 %v2890
    %v2892 = vpop.f32.mrf.mxu0
    %v2893 = vadd.f32 %v2860, %v2892
    %v2894 = vand.u32 %v480, 4294901760
    %2895 = vmatmul.f32.gmra.mxu0 %v2894
    %v2896 = vpop.f32.mrf.mxu0
    %v2897 = vadd.f32 %v2866, %v2896
    %2898 = vdwg.mxu0
    %2899 = vmatpush.msra.mxu0 0.0
    %2900 = vmatpush.msra.mxu0 0.0
    %2901 = vmatpush.msra.mxu0 0.0
    %2902 = vmatpush.msra.mxu0 0.0
    %2903 = vmatpush.msra.mxu0 0.0
    %2904 = vmatpush.msra.mxu0 0.0
    %2905 = vmatpush.msra.mxu0 0.0
    %2906 = vmatpush.msra.mxu0 0.0
    %2907 = vmatpush.msra.mxu0 0.0
    %2908 = vmatpush.msra.mxu0 0.0
    %2909 = vmatpush.msra.mxu0 0.0
    %2910 = vmatpush.msra.mxu0 0.0
    %2911 = vmatpush.msra.mxu0 0.0
    %2912 = vmatpush.msra.mxu0 0.0
    %v2913 = vand.u32 %v2734, 4294901760
    %2914 = vmatpush.msra.mxu0 %v2913
    %v2915 = vand.u32 %v2730, 4294901760
    %2916 = vmatpush.msra.mxu0 %v2915
    %v2917 = vand.u32 %v477, 4294901760
    %2918 = vmatmul.f32.gmra.mxu0 %v2917
    %v2919 = vpop.f32.mrf.mxu0
    %v2920 = vadd.f32 %v2893, %v2919
    %v2921 = vand.u32 %v480, 4294901760
    %2922 = vmatmul.f32.gmra.mxu0 %v2921
    %v2923 = vpop.f32.mrf.mxu0
    %v2924 = vadd.f32 %v2897, %v2923
    %2925 = vdwg.mxu0
    %v2926 = vmul.f32 %v666, %v666
    %v2927 = vmul.f32 %v670, %v670
    %v2928 = vmul.f32 %v1228, %v1228
    %v2929 = vmul.f32 %v1232, %v1232
    %v2930 = vmul.f32 %v666, %v1228
    %v2931 = vmul.f32 %v670, %v1232
    %v2932 = vsub.f32 %v1792, %v2926
    %v2933 = vsub.f32 %v1796, %v2927
    %v2934 = vsub.f32 %v2356, %v2928
    %v2935 = vsub.f32 %v2360, %v2929
    %v2936 = vsub.f32 %v2920, %v2930
    %v2937 = vsub.f32 %v2924, %v2931
    %v2938 = vmul.f32 %v2930, 2.0
    %v2939 = vmul.f32 %v2931, 2.0
    %v2940 = vadd.f32 %v2938, 0.0001
    %v2941 = vadd.f32 %v2939, 0.0001
    %v2942 = vmul.f32 %v2936, 2.0
    %v2943 = vmul.f32 %v2937, 2.0
    %v2944 = vadd.f32 %v2942, 0.0009
    %v2945 = vadd.f32 %v2943, 0.0009
    %v2946 = vmul.f32 %v2940, %v2944
    %v2947 = vmul.f32 %v2941, %v2945
    %v2948 = vadd.f32 %v2926, %v2928
    %v2949 = vadd.f32 %v2927, %v2929
    %v2950 = vadd.f32 %v2948, 0.0001
    %v2951 = vadd.f32 %v2949, 0.0001
    %v2952 = vadd.f32 %v2932, %v2934
    %v2953 = vadd.f32 %v2933, %v2935
    %v2954 = vadd.f32 %v2952, 0.0009
    %v2955 = vadd.f32 %v2953, 0.0009
    %v2956 = vmul.f32 %v2950, %v2954
    %v2957 = vmul.f32 %v2951, %v2955
    %v2958 = vrcp.pop %v2956
    %v2959 = vrcp.pop %v2957
    %v2960 = vmul.f32 %v2956, %v2958
    %v2961 = vmul.f32 %v2957, %v2959
    %v2962 = vsub.f32 2.0, %v2960
    %v2963 = vsub.f32 2.0, %v2961
    %v2964 = vmul.f32 %v2958, %v2962
    %v2965 = vmul.f32 %v2959, %v2963
    %v2966 = vmul.f32 %v2946, %v2964
    %v2967 = vmul.f32 %v2947, %v2965
    %v2968 = vadd.f32 %v2966, %v2967
    %2969 = vadd.xlane.f32.xlu0 %v2968
    %v2970 = vpop.xlane.xlu0 %2969
    %v2971 = vrot.slane %v2970, 4
    %v2972 = vadd.f32 %v2970, %v2971
    %v2973 = vrot.slane %v2972, 2
    %v2974 = vadd.f32 %v2972, %v2973
    %v2975 = vrot.slane %v2974, 1
    %v2976 = vadd.f32 %v2974, %v2975
    %s2977 = vtos %v2976
    %v2978 = vstv %s2977
    %2979 = vst [vmem:[#allocation10] sm:$0xff] %v2978
    // Predicated region
    $region34: #{tpu_custom_call.1} parent=1 // pred_check
      _
    $region35: #{tpu_custom_call.1} parent=1 // pred_check_branch
      %2981 = sbr.rel (0) target = $region37
    $region36: #{tpu_custom_call.1} parent=1 // pred_region
      %2983 = vsyncadd [#allocation4], 0
      %s2985 = sshll.u32 [#allocation10], 4
      %s2986 = int_to_ptr.vmem [resolvable:$true] %s2985
      %s2987 = sshll.u32 %s4, 4
      %s2988 = int_to_ptr.hbm [resolvable:$true] %s2987
      %2990 = dma.vmem_to_hbm [thread:$0]  %s2986, 128, %s2988, [#allocation4]
    $region37: #{tpu_custom_call.1} parent=1 // pred_fallthru
      _
    // Predicated region
    $region38: #{tpu_custom_call.1} parent=1 // pred_check
      _
    $region39: #{tpu_custom_call.1} parent=1 // pred_check_branch
      %2992 = sbr.rel (0) target = $region41
    $region40: #{tpu_custom_call.1} parent=1 // pred_region
      %2994 = dma.done [#allocation4], 128
    $region41: #{tpu_custom_call.1} parent=1 // pred_fallthru
      _
    %2995 = vsyncpa [#allocation3], 1
    %2996 = vsyncpa [#allocation6], 1
    %2997 = vsyncpa [#allocation9], 1
    %2998 = vsyncpa [#allocation4], 1

</llo_original>
